<compile_context>
chip_gen: v6e
topology: v6e:2x2x1
jax: 0.10.0
libtpu: 0.0.40
codegen_flags: <defaults>
</compile_context>

<pallas_src>
from itertools import combinations

import jax
import jax.numpy as jnp
from jax.experimental import pallas as pl
from jax.experimental.pallas import tpu as pltpu

# ---------------- small synthetic shapes / config ----------------
B, C, H, W = 2, 4, 16, 16
HID = 8                   # hidden channels of the synthetic backbone
NUM_SPLITS = 4
STRATEGY = "X:1"


def _pick_tile_hw(hw):
    # Lane-dense hw tiles: 128 at toy sizes so the parallel grid is actually exercised
    # (and shardable across v7x's 2 TCs); 1024-2048 at real sizes so the wTs DMA stream
    # pipelines behind the matmul while fitting v7x's 64 MiB VMEM (raise vmem_limit_bytes
    # on v6e for even larger tiles).
    if hw <= 256:
        return 128
    for t in (2048, 1024, 512, 256, 128):
        if hw % t == 0:
            return t
    return hw


# ---------------- Pallas kernel (grid over hw tiles) ----------------
def make_n2i_kernel(num_splits, b, c, hid):
    nc = num_splits  # 'X:1' -> one combination per excluded split

    def n2i_kernel(ys_ref,    # (S, C*B, HW/S)   per-split gathered measurements, bf16, resident
                   wTs_ref,   # (S, HW/S, T)     hw-tile of the per-split circulant^T rows, bf16
                   w1_ref,    # (HID, C)  f32, SMEM
                   b1_ref,    # (HID,)    f32, SMEM
                   w2_ref,    # (C, HID)  f32, SMEM
                   b2s_ref,   # (C,)      f32, SMEM  (= num_splits * b2, combo-sum folded)
                   out_ref):  # (C*B, T)  f32  summed reconstruction, rows grouped (channel, batch)
        # (1) backprojection of every split for this hw tile: one batched bf16 MXU matmul with
        #     f32 accumulation.  zs[s] = ys[s] @ wTs[s]  -> (S, C*B, T)
        #     (NOTE: K = HW/S = 64 at toy size only half-fills the MXU depth; at real sizes
        #      K >= 256 and this is the dominant, HBM-roofline-bound stream of wTs.)
        zs = jnp.einsum("sbk,skn->sbn", ys_ref[...], wTs_ref[...],
                        preferred_element_type=jnp.float32)

        # (2) the split row-masks partition HW, so sum_s zs == full backprojection.
        #     'X:1' combination j excludes exactly split j -> its backbone input is total - z_j.
        #     (Reverse of itertools.combinations order; valid because outputs are summed.)
        total = jnp.sum(zs, axis=0)                 # (C*B, T)
        inp = total[None, :, :] - zs                # (NC, C*B, T) f32, rows grouped (c, b)

        # (3) backbone conv1(1x1) + ReLU, fused with the combination sum.  Channel mixes are
        #     VPU scalar-broadcast FMAs (weights read from SMEM); rows are grouped by channel,
        #     so each channel is a contiguous static sublane slice (no in-kernel reshape).
        hs = []
        for o in range(hid):
            acc = w1_ref[o, 0] * inp[:, 0:b, :]
            for ci in range(1, c):
                acc = acc + w1_ref[o, ci] * inp[:, ci * b:(ci + 1) * b, :]
            acc = jnp.maximum(acc + b1_ref[o], 0.0)     # (NC, B, T)
            hs.append(jnp.sum(acc, axis=0))             # (B, T): reduced over combinations

        # (4) conv2(1x1) once, on the combo-summed hidden activations; b2 pre-scaled by NC.
        rows = []
        for co in range(c):
            r = w2_ref[co, 0] * hs[0]
            for o in range(1, hid):
                r = r + w2_ref[co, o] * hs[o]
            rows.append(r + b2s_ref[co])                # (B, T)

        out_ref[...] = jnp.concatenate(rows, axis=0)    # (C*B, T), rows grouped (c, b)

    return n2i_kernel


# ---------------- operator precompute (plain JAX, hoisted out of the forward path) ----------------
def build_inverse_circulant(blur_kernel, h, w):
    """Circulant matrix Wmat with Wmat @ vec(y) == irfft2(rfft2(y)/OTF)."""
    kh, kw = blur_kernel.shape
    psf = jnp.zeros((h, w), jnp.float32).at[:kh, :kw].set(blur_kernel)
    psf = jnp.roll(psf, (-(kh // 2), -(kw // 2)), axis=(0, 1))
    otf = jnp.fft.rfft2(psf)
    # TODO(synk): FFT itself has no Pallas equivalent; the spectral division is folded into this
    # precomputed spatial circular-convolution kernel.
    g = jnp.fft.irfft2(1.0 / otf, s=(h, w)).astype(jnp.float32)
    hh = (jnp.arange(h)[:, None] - jnp.arange(h)[None, :]) % h      # (h, h)
    ww = (jnp.arange(w)[:, None] - jnp.arange(w)[None, :]) % w      # (w, w)
    wmat = g[hh[:, None, :, None], ww[None, :, None, :]]            # (h, w, h, w)
    return wmat.reshape(h * w, h * w)


def precompute_operator(blur_kernel, h, w, num_splits):
    """Per-split row-gathered inverse-filter circulant (transposed).  Depends only on the blur
    kernel and geometry -> compute once and reuse across forward calls."""
    assert h % num_splits == 0
    hw, hws = h * w, (h // num_splits) * w
    wmat_t = build_inverse_circulant(blur_kernel, h, w).T           # (hw, hw) f32
    # rows k = hh*W + ww with hh % num_splits == j go to split j
    wTs = jnp.transpose(wmat_t.reshape(h // num_splits, num_splits, w, hw),
                        (1, 0, 2, 3)).reshape(num_splits, hws, hw)
    return wTs.astype(jnp.bfloat16)                                  # (ns, hws, hw)


# ---------------- forward (wrapper + pallas_call) ----------------
def noise2inverse_forward(y, wTs, w1, b1, w2, b2,
                          num_splits=NUM_SPLITS, strategy=STRATEGY):
    assert strategy == "X:1"
    b, c, h, w = y.shape
    ns = num_splits
    assert h % ns == 0
    cb, hw, hws = c * b, h * w, (h // ns) * w
    hid = w1.shape[0]

    tile = _pick_tile_hw(hw)
    assert hw % tile == 0

    # Per-split gather of the measurements y[:, :, j::ns, :], rows grouped (channel, batch) so
    # the kernel's channel mixes are contiguous sublane slices.  bf16 for the MXU matmul.
    ys = jnp.transpose(jnp.transpose(y, (1, 0, 2, 3)).reshape(c, b, h // ns, ns, w),
                       (3, 0, 1, 2, 4)).reshape(ns, cb, hws).astype(jnp.bfloat16)

    # conv2 bias folded over the combination sum (strategy 'X:1' has exactly ns combinations).
    b2s = (ns * b2).astype(jnp.float32)

    kernel = make_n2i_kernel(ns, b, c, hid)

    out2d = pl.pallas_call(
        kernel,
        out_shape=jax.ShapeDtypeStruct((cb, hw), jnp.float32),
        grid=(hw // tile,),
        in_specs=[
            pl.BlockSpec((ns, cb, hws), lambda i: (0, 0, 0)),        # ys: fully resident
            pl.BlockSpec((ns, hws, tile), lambda i: (0, 0, i)),      # wTs: streamed hw tiles
            pl.BlockSpec(memory_space=pltpu.MemorySpace.SMEM),       # w1  (HID, C)
            pl.BlockSpec(memory_space=pltpu.MemorySpace.SMEM),       # b1  (HID,)
            pl.BlockSpec(memory_space=pltpu.MemorySpace.SMEM),       # w2  (C, HID)
            pl.BlockSpec(memory_space=pltpu.MemorySpace.SMEM),       # ns * b2  (C,)
        ],
        out_specs=pl.BlockSpec((cb, tile), lambda i: (0, i)),
        # hw tiles are fully independent (1x1 convs + per-pixel sums) -> parallel axis
        # (sharded across v7x's 2 TensorCores; harmless on v5e/v6e).
        compiler_params=pltpu.CompilerParams(dimension_semantics=("parallel",)),
        # NOTE: at real image sizes also set vmem_limit_bytes with headroom for the wTs tiles.
    )(ys, wTs, w1.astype(jnp.float32), b1.astype(jnp.float32),
      w2.astype(jnp.float32), b2s)

    # rows are grouped (channel, batch); undoing that here is layout plumbing, not compute.
    return jnp.transpose(out2d.reshape(c, b, h, w), (1, 0, 2, 3))


# ---------------- pure-JAX reference (mirrors the PyTorch code) ----------------
def reference_forward(y, blur_kernel, w1, b1, w2, b2):
    b, c, h, w = y.shape
    kh, kw = blur_kernel.shape
    psf = jnp.zeros((h, w), jnp.float32).at[:kh, :kw].set(blur_kernel)
    psf = jnp.roll(psf, (-(kh // 2), -(kw // 2)), axis=(0, 1))
    otf = jnp.fft.rfft2(psf)

    def backproject(v):
        return jnp.fft.irfft2(jnp.fft.rfft2(v, axes=(-2, -1)) / otf,
                              s=(h, w), axes=(-2, -1)).astype(jnp.float32)

    slices = []
    for j in range(NUM_SPLITS):
        m = jnp.zeros_like(y).at[:, :, j::NUM_SPLITS, :].set(y[:, :, j::NUM_SPLITS, :])
        slices.append(backproject(m))

    def backbone(x):
        hid = jnp.einsum('oc,bchw->bohw', w1, x) + b1[None, :, None, None]
        hid = jnp.maximum(hid, 0.0)
        return jnp.einsum('co,bohw->bchw', w2, hid) + b2[None, :, None, None]

    num_input = NUM_SPLITS - 1 if STRATEGY == "X:1" else 1
    comb_idxs = list(combinations(range(NUM_SPLITS), num_input))
    recons = [backbone(sum(slices[j] for j in idxs)) for idxs in comb_idxs]
    return jnp.stack(recons).sum(axis=0)


if __name__ == "__main__":
    key = jax.random.PRNGKey(0)
    k_y, k_w1, k_b1, k_w2, k_b2 = jax.random.split(key, 5)

    y = jax.random.normal(k_y, (B, C, H, W), jnp.float32)

    # physics_filter (after the module's squeeze) -> 2-D blur kernel with a strictly
    # non-vanishing OTF so the inverse filter is well defined.
    blur_kernel = jnp.array([[0.00, 0.05, 0.00],
                             [0.05, 0.80, 0.05],
                             [0.00, 0.05, 0.00]], jnp.float32)

    # deterministic synthetic backbone weights (Conv1x1 -> ReLU -> Conv1x1)
    w1 = 0.3 * jax.random.normal(k_w1, (HID, C), jnp.float32)
    b1 = 0.1 * jax.random.normal(k_b1, (HID,), jnp.float32)
    w2 = 0.3 * jax.random.normal(k_w2, (C, HID), jnp.float32)
    b2 = 0.1 * jax.random.normal(k_b2, (C,), jnp.float32)

    # operator precompute is per-(blur_kernel, geometry): done once, outside the forward path.
    wTs = precompute_operator(blur_kernel, H, W, NUM_SPLITS)

    out = noise2inverse_forward(y, wTs, w1, b1, w2, b2)
    out = jax.block_until_ready(out)

    ref = reference_forward(y, blur_kernel, w1, b1, w2, b2)
    assert out.shape == (B, C, H, W)
    max_err = float(jnp.max(jnp.abs(out - ref)))
    assert jnp.allclose(out, ref, rtol=5e-2, atol=5e-2), f"max abs err {max_err}"

    print("KERNEL_OK")
</pallas_src>

<mosaic_0001>
module attributes {stable_mosaic.version = 11 : i64} {
  func.func @n2i_kernel(%arg0: i32, %arg1: memref<4x8x64xbf16, #tpu.memory_space<vmem>>, %arg2: memref<4x64x128xbf16, #tpu.memory_space<vmem>>, %arg3: memref<8x4xf32, #tpu.memory_space<smem>>, %arg4: memref<8xf32, #tpu.memory_space<smem>>, %arg5: memref<4x8xf32, #tpu.memory_space<smem>>, %arg6: memref<4xf32, #tpu.memory_space<smem>>, %arg7: memref<8x128xf32, #tpu.memory_space<vmem>>) attributes {dimension_semantics = [#tpu.dimension_semantics<parallel>], iteration_bounds = array<i64: 2>, scalar_prefetch = 0 : i64, scratch_operands = 0 : i64, tpu.core_type = #tpu.core_type<tc>, window_params = [{pipeline_mode = #tpu.pipeline_mode<synchronous>, transform_indices = @transform_0, window_bounds = array<i64: 4, 8, 64>}, {transform_indices = @transform_1, window_bounds = array<i64: 4, 64, 128>}, {transform_indices = @transform_2, window_bounds = array<i64: 8, 4>}, {transform_indices = @transform_3, window_bounds = array<i64: 8>}, {transform_indices = @transform_4, window_bounds = array<i64: 4, 8>}, {transform_indices = @transform_5, window_bounds = array<i64: 4>}, {transform_indices = @transform_6, window_bounds = array<i64: 8, 128>}]} {
    %c0 = arith.constant 0 : index
    %c0_0 = arith.constant 0 : index
    %c0_1 = arith.constant 0 : index
    %0 = vector.load %arg1[%c0, %c0_0, %c0_1] : memref<4x8x64xbf16, #tpu.memory_space<vmem>>, vector<4x8x64xbf16>
    %c0_2 = arith.constant 0 : index
    %c0_3 = arith.constant 0 : index
    %c0_4 = arith.constant 0 : index
    %1 = vector.load %arg2[%c0_2, %c0_3, %c0_4] : memref<4x64x128xbf16, #tpu.memory_space<vmem>>, vector<4x64x128xbf16>
    "tpu.trace_start"() <{level = 10 : i32, message = "sbk,skn->sbn"}> : () -> ()
    %cst = arith.constant dense<0.000000e+00> : vector<4x8x128xf32>
    %2 = tpu.matmul %0, %1, %cst {dimension_numbers = #tpu.dot_dimension_numbers<[2], [1], [1], [2], [0, 0, 0, 1, 1, 2], [0], [0]>} : vector<4x8x64xbf16>, vector<4x64x128xbf16>, vector<4x8x128xf32> -> vector<4x8x128xf32>
    "tpu.trace_stop"() : () -> ()
    %cst_5 = arith.constant dense<0.000000e+00> : vector<8x128xf32>
    %3 = vector.multi_reduction <add>, %2, %cst_5 [0] : vector<4x8x128xf32> to vector<8x128xf32>
    %4 = vector.shape_cast %3 : vector<8x128xf32> to vector<1x8x128xf32>
    %5 = vector.broadcast %4 : vector<1x8x128xf32> to vector<4x8x128xf32>
    %6 = arith.subf %5, %2 : vector<4x8x128xf32>
    %c0_6 = arith.constant 0 : index
    %c0_7 = arith.constant 0 : index
    %7 = memref.load %arg3[%c0_6, %c0_7] : memref<8x4xf32, #tpu.memory_space<smem>>
    %8 = vector.extract_strided_slice %6 {offsets = [0, 0, 0], sizes = [4, 2, 128], strides = [1, 1, 1]} : vector<4x8x128xf32> to vector<4x2x128xf32>
    %9 = vector.broadcast %7 : f32 to vector<4x2x128xf32>
    %10 = arith.mulf %9, %8 : vector<4x2x128xf32>
    %c0_8 = arith.constant 0 : index
    %c1 = arith.constant 1 : index
    %11 = memref.load %arg3[%c0_8, %c1] : memref<8x4xf32, #tpu.memory_space<smem>>
    %12 = vector.extract_strided_slice %6 {offsets = [0, 2, 0], sizes = [4, 2, 128], strides = [1, 1, 1]} : vector<4x8x128xf32> to vector<4x2x128xf32>
    %13 = vector.broadcast %11 : f32 to vector<4x2x128xf32>
    %14 = arith.mulf %13, %12 : vector<4x2x128xf32>
    %15 = arith.addf %10, %14 : vector<4x2x128xf32>
    %c0_9 = arith.constant 0 : index
    %c2 = arith.constant 2 : index
    %16 = memref.load %arg3[%c0_9, %c2] : memref<8x4xf32, #tpu.memory_space<smem>>
    %17 = vector.extract_strided_slice %6 {offsets = [0, 4, 0], sizes = [4, 2, 128], strides = [1, 1, 1]} : vector<4x8x128xf32> to vector<4x2x128xf32>
    %18 = vector.broadcast %16 : f32 to vector<4x2x128xf32>
    %19 = arith.mulf %18, %17 : vector<4x2x128xf32>
    %20 = arith.addf %15, %19 : vector<4x2x128xf32>
    %c0_10 = arith.constant 0 : index
    %c3 = arith.constant 3 : index
    %21 = memref.load %arg3[%c0_10, %c3] : memref<8x4xf32, #tpu.memory_space<smem>>
    %22 = vector.extract_strided_slice %6 {offsets = [0, 6, 0], sizes = [4, 2, 128], strides = [1, 1, 1]} : vector<4x8x128xf32> to vector<4x2x128xf32>
    %23 = vector.broadcast %21 : f32 to vector<4x2x128xf32>
    %24 = arith.mulf %23, %22 : vector<4x2x128xf32>
    %25 = arith.addf %20, %24 : vector<4x2x128xf32>
    %c0_11 = arith.constant 0 : index
    %26 = memref.load %arg4[%c0_11] : memref<8xf32, #tpu.memory_space<smem>>
    %27 = vector.broadcast %26 : f32 to vector<4x2x128xf32>
    %28 = arith.addf %25, %27 : vector<4x2x128xf32>
    %cst_12 = arith.constant 0.000000e+00 : f32
    %29 = vector.broadcast %cst_12 : f32 to vector<4x2x128xf32>
    %30 = arith.maximumf %28, %29 : vector<4x2x128xf32>
    %cst_13 = arith.constant dense<0.000000e+00> : vector<2x128xf32>
    %31 = vector.multi_reduction <add>, %30, %cst_13 [0] : vector<4x2x128xf32> to vector<2x128xf32>
    %c1_14 = arith.constant 1 : index
    %c0_15 = arith.constant 0 : index
    %32 = memref.load %arg3[%c1_14, %c0_15] : memref<8x4xf32, #tpu.memory_space<smem>>
    %33 = vector.extract_strided_slice %6 {offsets = [0, 0, 0], sizes = [4, 2, 128], strides = [1, 1, 1]} : vector<4x8x128xf32> to vector<4x2x128xf32>
    %34 = vector.broadcast %32 : f32 to vector<4x2x128xf32>
    %35 = arith.mulf %34, %33 : vector<4x2x128xf32>
    %c1_16 = arith.constant 1 : index
    %c1_17 = arith.constant 1 : index
    %36 = memref.load %arg3[%c1_16, %c1_17] : memref<8x4xf32, #tpu.memory_space<smem>>
    %37 = vector.extract_strided_slice %6 {offsets = [0, 2, 0], sizes = [4, 2, 128], strides = [1, 1, 1]} : vector<4x8x128xf32> to vector<4x2x128xf32>
    %38 = vector.broadcast %36 : f32 to vector<4x2x128xf32>
    %39 = arith.mulf %38, %37 : vector<4x2x128xf32>
    %40 = arith.addf %35, %39 : vector<4x2x128xf32>
    %c1_18 = arith.constant 1 : index
    %c2_19 = arith.constant 2 : index
    %41 = memref.load %arg3[%c1_18, %c2_19] : memref<8x4xf32, #tpu.memory_space<smem>>
    %42 = vector.extract_strided_slice %6 {offsets = [0, 4, 0], sizes = [4, 2, 128], strides = [1, 1, 1]} : vector<4x8x128xf32> to vector<4x2x128xf32>
    %43 = vector.broadcast %41 : f32 to vector<4x2x128xf32>
    %44 = arith.mulf %43, %42 : vector<4x2x128xf32>
    %45 = arith.addf %40, %44 : vector<4x2x128xf32>
    %c1_20 = arith.constant 1 : index
    %c3_21 = arith.constant 3 : index
    %46 = memref.load %arg3[%c1_20, %c3_21] : memref<8x4xf32, #tpu.memory_space<smem>>
    %47 = vector.extract_strided_slice %6 {offsets = [0, 6, 0], sizes = [4, 2, 128], strides = [1, 1, 1]} : vector<4x8x128xf32> to vector<4x2x128xf32>
    %48 = vector.broadcast %46 : f32 to vector<4x2x128xf32>
    %49 = arith.mulf %48, %47 : vector<4x2x128xf32>
    %50 = arith.addf %45, %49 : vector<4x2x128xf32>
    %c1_22 = arith.constant 1 : index
    %51 = memref.load %arg4[%c1_22] : memref<8xf32, #tpu.memory_space<smem>>
    %52 = vector.broadcast %51 : f32 to vector<4x2x128xf32>
    %53 = arith.addf %50, %52 : vector<4x2x128xf32>
    %cst_23 = arith.constant 0.000000e+00 : f32
    %54 = vector.broadcast %cst_23 : f32 to vector<4x2x128xf32>
    %55 = arith.maximumf %53, %54 : vector<4x2x128xf32>
    %cst_24 = arith.constant dense<0.000000e+00> : vector<2x128xf32>
    %56 = vector.multi_reduction <add>, %55, %cst_24 [0] : vector<4x2x128xf32> to vector<2x128xf32>
    %c2_25 = arith.constant 2 : index
    %c0_26 = arith.constant 0 : index
    %57 = memref.load %arg3[%c2_25, %c0_26] : memref<8x4xf32, #tpu.memory_space<smem>>
    %58 = vector.extract_strided_slice %6 {offsets = [0, 0, 0], sizes = [4, 2, 128], strides = [1, 1, 1]} : vector<4x8x128xf32> to vector<4x2x128xf32>
    %59 = vector.broadcast %57 : f32 to vector<4x2x128xf32>
    %60 = arith.mulf %59, %58 : vector<4x2x128xf32>
    %c2_27 = arith.constant 2 : index
    %c1_28 = arith.constant 1 : index
    %61 = memref.load %arg3[%c2_27, %c1_28] : memref<8x4xf32, #tpu.memory_space<smem>>
    %62 = vector.extract_strided_slice %6 {offsets = [0, 2, 0], sizes = [4, 2, 128], strides = [1, 1, 1]} : vector<4x8x128xf32> to vector<4x2x128xf32>
    %63 = vector.broadcast %61 : f32 to vector<4x2x128xf32>
    %64 = arith.mulf %63, %62 : vector<4x2x128xf32>
    %65 = arith.addf %60, %64 : vector<4x2x128xf32>
    %c2_29 = arith.constant 2 : index
    %c2_30 = arith.constant 2 : index
    %66 = memref.load %arg3[%c2_29, %c2_30] : memref<8x4xf32, #tpu.memory_space<smem>>
    %67 = vector.extract_strided_slice %6 {offsets = [0, 4, 0], sizes = [4, 2, 128], strides = [1, 1, 1]} : vector<4x8x128xf32> to vector<4x2x128xf32>
    %68 = vector.broadcast %66 : f32 to vector<4x2x128xf32>
    %69 = arith.mulf %68, %67 : vector<4x2x128xf32>
    %70 = arith.addf %65, %69 : vector<4x2x128xf32>
    %c2_31 = arith.constant 2 : index
    %c3_32 = arith.constant 3 : index
    %71 = memref.load %arg3[%c2_31, %c3_32] : memref<8x4xf32, #tpu.memory_space<smem>>
    %72 = vector.extract_strided_slice %6 {offsets = [0, 6, 0], sizes = [4, 2, 128], strides = [1, 1, 1]} : vector<4x8x128xf32> to vector<4x2x128xf32>
    %73 = vector.broadcast %71 : f32 to vector<4x2x128xf32>
    %74 = arith.mulf %73, %72 : vector<4x2x128xf32>
    %75 = arith.addf %70, %74 : vector<4x2x128xf32>
    %c2_33 = arith.constant 2 : index
    %76 = memref.load %arg4[%c2_33] : memref<8xf32, #tpu.memory_space<smem>>
    %77 = vector.broadcast %76 : f32 to vector<4x2x128xf32>
    %78 = arith.addf %75, %77 : vector<4x2x128xf32>
    %cst_34 = arith.constant 0.000000e+00 : f32
    %79 = vector.broadcast %cst_34 : f32 to vector<4x2x128xf32>
    %80 = arith.maximumf %78, %79 : vector<4x2x128xf32>
    %cst_35 = arith.constant dense<0.000000e+00> : vector<2x128xf32>
    %81 = vector.multi_reduction <add>, %80, %cst_35 [0] : vector<4x2x128xf32> to vector<2x128xf32>
    %c3_36 = arith.constant 3 : index
    %c0_37 = arith.constant 0 : index
    %82 = memref.load %arg3[%c3_36, %c0_37] : memref<8x4xf32, #tpu.memory_space<smem>>
    %83 = vector.extract_strided_slice %6 {offsets = [0, 0, 0], sizes = [4, 2, 128], strides = [1, 1, 1]} : vector<4x8x128xf32> to vector<4x2x128xf32>
    %84 = vector.broadcast %82 : f32 to vector<4x2x128xf32>
    %85 = arith.mulf %84, %83 : vector<4x2x128xf32>
    %c3_38 = arith.constant 3 : index
    %c1_39 = arith.constant 1 : index
    %86 = memref.load %arg3[%c3_38, %c1_39] : memref<8x4xf32, #tpu.memory_space<smem>>
    %87 = vector.extract_strided_slice %6 {offsets = [0, 2, 0], sizes = [4, 2, 128], strides = [1, 1, 1]} : vector<4x8x128xf32> to vector<4x2x128xf32>
    %88 = vector.broadcast %86 : f32 to vector<4x2x128xf32>
    %89 = arith.mulf %88, %87 : vector<4x2x128xf32>
    %90 = arith.addf %85, %89 : vector<4x2x128xf32>
    %c3_40 = arith.constant 3 : index
    %c2_41 = arith.constant 2 : index
    %91 = memref.load %arg3[%c3_40, %c2_41] : memref<8x4xf32, #tpu.memory_space<smem>>
    %92 = vector.extract_strided_slice %6 {offsets = [0, 4, 0], sizes = [4, 2, 128], strides = [1, 1, 1]} : vector<4x8x128xf32> to vector<4x2x128xf32>
    %93 = vector.broadcast %91 : f32 to vector<4x2x128xf32>
    %94 = arith.mulf %93, %92 : vector<4x2x128xf32>
    %95 = arith.addf %90, %94 : vector<4x2x128xf32>
    %c3_42 = arith.constant 3 : index
    %c3_43 = arith.constant 3 : index
    %96 = memref.load %arg3[%c3_42, %c3_43] : memref<8x4xf32, #tpu.memory_space<smem>>
    %97 = vector.extract_strided_slice %6 {offsets = [0, 6, 0], sizes = [4, 2, 128], strides = [1, 1, 1]} : vector<4x8x128xf32> to vector<4x2x128xf32>
    %98 = vector.broadcast %96 : f32 to vector<4x2x128xf32>
    %99 = arith.mulf %98, %97 : vector<4x2x128xf32>
    %100 = arith.addf %95, %99 : vector<4x2x128xf32>
    %c3_44 = arith.constant 3 : index
    %101 = memref.load %arg4[%c3_44] : memref<8xf32, #tpu.memory_space<smem>>
    %102 = vector.broadcast %101 : f32 to vector<4x2x128xf32>
    %103 = arith.addf %100, %102 : vector<4x2x128xf32>
    %cst_45 = arith.constant 0.000000e+00 : f32
    %104 = vector.broadcast %cst_45 : f32 to vector<4x2x128xf32>
    %105 = arith.maximumf %103, %104 : vector<4x2x128xf32>
    %cst_46 = arith.constant dense<0.000000e+00> : vector<2x128xf32>
    %106 = vector.multi_reduction <add>, %105, %cst_46 [0] : vector<4x2x128xf32> to vector<2x128xf32>
    %c4 = arith.constant 4 : index
    %c0_47 = arith.constant 0 : index
    %107 = memref.load %arg3[%c4, %c0_47] : memref<8x4xf32, #tpu.memory_space<smem>>
    %108 = vector.extract_strided_slice %6 {offsets = [0, 0, 0], sizes = [4, 2, 128], strides = [1, 1, 1]} : vector<4x8x128xf32> to vector<4x2x128xf32>
    %109 = vector.broadcast %107 : f32 to vector<4x2x128xf32>
    %110 = arith.mulf %109, %108 : vector<4x2x128xf32>
    %c4_48 = arith.constant 4 : index
    %c1_49 = arith.constant 1 : index
    %111 = memref.load %arg3[%c4_48, %c1_49] : memref<8x4xf32, #tpu.memory_space<smem>>
    %112 = vector.extract_strided_slice %6 {offsets = [0, 2, 0], sizes = [4, 2, 128], strides = [1, 1, 1]} : vector<4x8x128xf32> to vector<4x2x128xf32>
    %113 = vector.broadcast %111 : f32 to vector<4x2x128xf32>
    %114 = arith.mulf %113, %112 : vector<4x2x128xf32>
    %115 = arith.addf %110, %114 : vector<4x2x128xf32>
    %c4_50 = arith.constant 4 : index
    %c2_51 = arith.constant 2 : index
    %116 = memref.load %arg3[%c4_50, %c2_51] : memref<8x4xf32, #tpu.memory_space<smem>>
    %117 = vector.extract_strided_slice %6 {offsets = [0, 4, 0], sizes = [4, 2, 128], strides = [1, 1, 1]} : vector<4x8x128xf32> to vector<4x2x128xf32>
    %118 = vector.broadcast %116 : f32 to vector<4x2x128xf32>
    %119 = arith.mulf %118, %117 : vector<4x2x128xf32>
    %120 = arith.addf %115, %119 : vector<4x2x128xf32>
    %c4_52 = arith.constant 4 : index
    %c3_53 = arith.constant 3 : index
    %121 = memref.load %arg3[%c4_52, %c3_53] : memref<8x4xf32, #tpu.memory_space<smem>>
    %122 = vector.extract_strided_slice %6 {offsets = [0, 6, 0], sizes = [4, 2, 128], strides = [1, 1, 1]} : vector<4x8x128xf32> to vector<4x2x128xf32>
    %123 = vector.broadcast %121 : f32 to vector<4x2x128xf32>
    %124 = arith.mulf %123, %122 : vector<4x2x128xf32>
    %125 = arith.addf %120, %124 : vector<4x2x128xf32>
    %c4_54 = arith.constant 4 : index
    %126 = memref.load %arg4[%c4_54] : memref<8xf32, #tpu.memory_space<smem>>
    %127 = vector.broadcast %126 : f32 to vector<4x2x128xf32>
    %128 = arith.addf %125, %127 : vector<4x2x128xf32>
    %cst_55 = arith.constant 0.000000e+00 : f32
    %129 = vector.broadcast %cst_55 : f32 to vector<4x2x128xf32>
    %130 = arith.maximumf %128, %129 : vector<4x2x128xf32>
    %cst_56 = arith.constant dense<0.000000e+00> : vector<2x128xf32>
    %131 = vector.multi_reduction <add>, %130, %cst_56 [0] : vector<4x2x128xf32> to vector<2x128xf32>
    %c5 = arith.constant 5 : index
    %c0_57 = arith.constant 0 : index
    %132 = memref.load %arg3[%c5, %c0_57] : memref<8x4xf32, #tpu.memory_space<smem>>
    %133 = vector.extract_strided_slice %6 {offsets = [0, 0, 0], sizes = [4, 2, 128], strides = [1, 1, 1]} : vector<4x8x128xf32> to vector<4x2x128xf32>
    %134 = vector.broadcast %132 : f32 to vector<4x2x128xf32>
    %135 = arith.mulf %134, %133 : vector<4x2x128xf32>
    %c5_58 = arith.constant 5 : index
    %c1_59 = arith.constant 1 : index
    %136 = memref.load %arg3[%c5_58, %c1_59] : memref<8x4xf32, #tpu.memory_space<smem>>
    %137 = vector.extract_strided_slice %6 {offsets = [0, 2, 0], sizes = [4, 2, 128], strides = [1, 1, 1]} : vector<4x8x128xf32> to vector<4x2x128xf32>
    %138 = vector.broadcast %136 : f32 to vector<4x2x128xf32>
    %139 = arith.mulf %138, %137 : vector<4x2x128xf32>
    %140 = arith.addf %135, %139 : vector<4x2x128xf32>
    %c5_60 = arith.constant 5 : index
    %c2_61 = arith.constant 2 : index
    %141 = memref.load %arg3[%c5_60, %c2_61] : memref<8x4xf32, #tpu.memory_space<smem>>
    %142 = vector.extract_strided_slice %6 {offsets = [0, 4, 0], sizes = [4, 2, 128], strides = [1, 1, 1]} : vector<4x8x128xf32> to vector<4x2x128xf32>
    %143 = vector.broadcast %141 : f32 to vector<4x2x128xf32>
    %144 = arith.mulf %143, %142 : vector<4x2x128xf32>
    %145 = arith.addf %140, %144 : vector<4x2x128xf32>
    %c5_62 = arith.constant 5 : index
    %c3_63 = arith.constant 3 : index
    %146 = memref.load %arg3[%c5_62, %c3_63] : memref<8x4xf32, #tpu.memory_space<smem>>
    %147 = vector.extract_strided_slice %6 {offsets = [0, 6, 0], sizes = [4, 2, 128], strides = [1, 1, 1]} : vector<4x8x128xf32> to vector<4x2x128xf32>
    %148 = vector.broadcast %146 : f32 to vector<4x2x128xf32>
    %149 = arith.mulf %148, %147 : vector<4x2x128xf32>
    %150 = arith.addf %145, %149 : vector<4x2x128xf32>
    %c5_64 = arith.constant 5 : index
    %151 = memref.load %arg4[%c5_64] : memref<8xf32, #tpu.memory_space<smem>>
    %152 = vector.broadcast %151 : f32 to vector<4x2x128xf32>
    %153 = arith.addf %150, %152 : vector<4x2x128xf32>
    %cst_65 = arith.constant 0.000000e+00 : f32
    %154 = vector.broadcast %cst_65 : f32 to vector<4x2x128xf32>
    %155 = arith.maximumf %153, %154 : vector<4x2x128xf32>
    %cst_66 = arith.constant dense<0.000000e+00> : vector<2x128xf32>
    %156 = vector.multi_reduction <add>, %155, %cst_66 [0] : vector<4x2x128xf32> to vector<2x128xf32>
    %c6 = arith.constant 6 : index
    %c0_67 = arith.constant 0 : index
    %157 = memref.load %arg3[%c6, %c0_67] : memref<8x4xf32, #tpu.memory_space<smem>>
    %158 = vector.extract_strided_slice %6 {offsets = [0, 0, 0], sizes = [4, 2, 128], strides = [1, 1, 1]} : vector<4x8x128xf32> to vector<4x2x128xf32>
    %159 = vector.broadcast %157 : f32 to vector<4x2x128xf32>
    %160 = arith.mulf %159, %158 : vector<4x2x128xf32>
    %c6_68 = arith.constant 6 : index
    %c1_69 = arith.constant 1 : index
    %161 = memref.load %arg3[%c6_68, %c1_69] : memref<8x4xf32, #tpu.memory_space<smem>>
    %162 = vector.extract_strided_slice %6 {offsets = [0, 2, 0], sizes = [4, 2, 128], strides = [1, 1, 1]} : vector<4x8x128xf32> to vector<4x2x128xf32>
    %163 = vector.broadcast %161 : f32 to vector<4x2x128xf32>
    %164 = arith.mulf %163, %162 : vector<4x2x128xf32>
    %165 = arith.addf %160, %164 : vector<4x2x128xf32>
    %c6_70 = arith.constant 6 : index
    %c2_71 = arith.constant 2 : index
    %166 = memref.load %arg3[%c6_70, %c2_71] : memref<8x4xf32, #tpu.memory_space<smem>>
    %167 = vector.extract_strided_slice %6 {offsets = [0, 4, 0], sizes = [4, 2, 128], strides = [1, 1, 1]} : vector<4x8x128xf32> to vector<4x2x128xf32>
    %168 = vector.broadcast %166 : f32 to vector<4x2x128xf32>
    %169 = arith.mulf %168, %167 : vector<4x2x128xf32>
    %170 = arith.addf %165, %169 : vector<4x2x128xf32>
    %c6_72 = arith.constant 6 : index
    %c3_73 = arith.constant 3 : index
    %171 = memref.load %arg3[%c6_72, %c3_73] : memref<8x4xf32, #tpu.memory_space<smem>>
    %172 = vector.extract_strided_slice %6 {offsets = [0, 6, 0], sizes = [4, 2, 128], strides = [1, 1, 1]} : vector<4x8x128xf32> to vector<4x2x128xf32>
    %173 = vector.broadcast %171 : f32 to vector<4x2x128xf32>
    %174 = arith.mulf %173, %172 : vector<4x2x128xf32>
    %175 = arith.addf %170, %174 : vector<4x2x128xf32>
    %c6_74 = arith.constant 6 : index
    %176 = memref.load %arg4[%c6_74] : memref<8xf32, #tpu.memory_space<smem>>
    %177 = vector.broadcast %176 : f32 to vector<4x2x128xf32>
    %178 = arith.addf %175, %177 : vector<4x2x128xf32>
    %cst_75 = arith.constant 0.000000e+00 : f32
    %179 = vector.broadcast %cst_75 : f32 to vector<4x2x128xf32>
    %180 = arith.maximumf %178, %179 : vector<4x2x128xf32>
    %cst_76 = arith.constant dense<0.000000e+00> : vector<2x128xf32>
    %181 = vector.multi_reduction <add>, %180, %cst_76 [0] : vector<4x2x128xf32> to vector<2x128xf32>
    %c7 = arith.constant 7 : index
    %c0_77 = arith.constant 0 : index
    %182 = memref.load %arg3[%c7, %c0_77] : memref<8x4xf32, #tpu.memory_space<smem>>
    %183 = vector.extract_strided_slice %6 {offsets = [0, 0, 0], sizes = [4, 2, 128], strides = [1, 1, 1]} : vector<4x8x128xf32> to vector<4x2x128xf32>
    %184 = vector.broadcast %182 : f32 to vector<4x2x128xf32>
    %185 = arith.mulf %184, %183 : vector<4x2x128xf32>
    %c7_78 = arith.constant 7 : index
    %c1_79 = arith.constant 1 : index
    %186 = memref.load %arg3[%c7_78, %c1_79] : memref<8x4xf32, #tpu.memory_space<smem>>
    %187 = vector.extract_strided_slice %6 {offsets = [0, 2, 0], sizes = [4, 2, 128], strides = [1, 1, 1]} : vector<4x8x128xf32> to vector<4x2x128xf32>
    %188 = vector.broadcast %186 : f32 to vector<4x2x128xf32>
    %189 = arith.mulf %188, %187 : vector<4x2x128xf32>
    %190 = arith.addf %185, %189 : vector<4x2x128xf32>
    %c7_80 = arith.constant 7 : index
    %c2_81 = arith.constant 2 : index
    %191 = memref.load %arg3[%c7_80, %c2_81] : memref<8x4xf32, #tpu.memory_space<smem>>
    %192 = vector.extract_strided_slice %6 {offsets = [0, 4, 0], sizes = [4, 2, 128], strides = [1, 1, 1]} : vector<4x8x128xf32> to vector<4x2x128xf32>
    %193 = vector.broadcast %191 : f32 to vector<4x2x128xf32>
    %194 = arith.mulf %193, %192 : vector<4x2x128xf32>
    %195 = arith.addf %190, %194 : vector<4x2x128xf32>
    %c7_82 = arith.constant 7 : index
    %c3_83 = arith.constant 3 : index
    %196 = memref.load %arg3[%c7_82, %c3_83] : memref<8x4xf32, #tpu.memory_space<smem>>
    %197 = vector.extract_strided_slice %6 {offsets = [0, 6, 0], sizes = [4, 2, 128], strides = [1, 1, 1]} : vector<4x8x128xf32> to vector<4x2x128xf32>
    %198 = vector.broadcast %196 : f32 to vector<4x2x128xf32>
    %199 = arith.mulf %198, %197 : vector<4x2x128xf32>
    %200 = arith.addf %195, %199 : vector<4x2x128xf32>
    %c7_84 = arith.constant 7 : index
    %201 = memref.load %arg4[%c7_84] : memref<8xf32, #tpu.memory_space<smem>>
    %202 = vector.broadcast %201 : f32 to vector<4x2x128xf32>
    %203 = arith.addf %200, %202 : vector<4x2x128xf32>
    %cst_85 = arith.constant 0.000000e+00 : f32
    %204 = vector.broadcast %cst_85 : f32 to vector<4x2x128xf32>
    %205 = arith.maximumf %203, %204 : vector<4x2x128xf32>
    %cst_86 = arith.constant dense<0.000000e+00> : vector<2x128xf32>
    %206 = vector.multi_reduction <add>, %205, %cst_86 [0] : vector<4x2x128xf32> to vector<2x128xf32>
    %c0_87 = arith.constant 0 : index
    %c0_88 = arith.constant 0 : index
    %207 = memref.load %arg5[%c0_87, %c0_88] : memref<4x8xf32, #tpu.memory_space<smem>>
    %208 = vector.broadcast %207 : f32 to vector<2x128xf32>
    %209 = arith.mulf %208, %31 : vector<2x128xf32>
    %c0_89 = arith.constant 0 : index
    %c1_90 = arith.constant 1 : index
    %210 = memref.load %arg5[%c0_89, %c1_90] : memref<4x8xf32, #tpu.memory_space<smem>>
    %211 = vector.broadcast %210 : f32 to vector<2x128xf32>
    %212 = arith.mulf %211, %56 : vector<2x128xf32>
    %213 = arith.addf %209, %212 : vector<2x128xf32>
    %c0_91 = arith.constant 0 : index
    %c2_92 = arith.constant 2 : index
    %214 = memref.load %arg5[%c0_91, %c2_92] : memref<4x8xf32, #tpu.memory_space<smem>>
    %215 = vector.broadcast %214 : f32 to vector<2x128xf32>
    %216 = arith.mulf %215, %81 : vector<2x128xf32>
    %217 = arith.addf %213, %216 : vector<2x128xf32>
    %c0_93 = arith.constant 0 : index
    %c3_94 = arith.constant 3 : index
    %218 = memref.load %arg5[%c0_93, %c3_94] : memref<4x8xf32, #tpu.memory_space<smem>>
    %219 = vector.broadcast %218 : f32 to vector<2x128xf32>
    %220 = arith.mulf %219, %106 : vector<2x128xf32>
    %221 = arith.addf %217, %220 : vector<2x128xf32>
    %c0_95 = arith.constant 0 : index
    %c4_96 = arith.constant 4 : index
    %222 = memref.load %arg5[%c0_95, %c4_96] : memref<4x8xf32, #tpu.memory_space<smem>>
    %223 = vector.broadcast %222 : f32 to vector<2x128xf32>
    %224 = arith.mulf %223, %131 : vector<2x128xf32>
    %225 = arith.addf %221, %224 : vector<2x128xf32>
    %c0_97 = arith.constant 0 : index
    %c5_98 = arith.constant 5 : index
    %226 = memref.load %arg5[%c0_97, %c5_98] : memref<4x8xf32, #tpu.memory_space<smem>>
    %227 = vector.broadcast %226 : f32 to vector<2x128xf32>
    %228 = arith.mulf %227, %156 : vector<2x128xf32>
    %229 = arith.addf %225, %228 : vector<2x128xf32>
    %c0_99 = arith.constant 0 : index
    %c6_100 = arith.constant 6 : index
    %230 = memref.load %arg5[%c0_99, %c6_100] : memref<4x8xf32, #tpu.memory_space<smem>>
    %231 = vector.broadcast %230 : f32 to vector<2x128xf32>
    %232 = arith.mulf %231, %181 : vector<2x128xf32>
    %233 = arith.addf %229, %232 : vector<2x128xf32>
    %c0_101 = arith.constant 0 : index
    %c7_102 = arith.constant 7 : index
    %234 = memref.load %arg5[%c0_101, %c7_102] : memref<4x8xf32, #tpu.memory_space<smem>>
    %235 = vector.broadcast %234 : f32 to vector<2x128xf32>
    %236 = arith.mulf %235, %206 : vector<2x128xf32>
    %237 = arith.addf %233, %236 : vector<2x128xf32>
    %c0_103 = arith.constant 0 : index
    %238 = memref.load %arg6[%c0_103] : memref<4xf32, #tpu.memory_space<smem>>
    %239 = vector.broadcast %238 : f32 to vector<2x128xf32>
    %240 = arith.addf %237, %239 : vector<2x128xf32>
    %c1_104 = arith.constant 1 : index
    %c0_105 = arith.constant 0 : index
    %241 = memref.load %arg5[%c1_104, %c0_105] : memref<4x8xf32, #tpu.memory_space<smem>>
    %242 = vector.broadcast %241 : f32 to vector<2x128xf32>
    %243 = arith.mulf %242, %31 : vector<2x128xf32>
    %c1_106 = arith.constant 1 : index
    %c1_107 = arith.constant 1 : index
    %244 = memref.load %arg5[%c1_106, %c1_107] : memref<4x8xf32, #tpu.memory_space<smem>>
    %245 = vector.broadcast %244 : f32 to vector<2x128xf32>
    %246 = arith.mulf %245, %56 : vector<2x128xf32>
    %247 = arith.addf %243, %246 : vector<2x128xf32>
    %c1_108 = arith.constant 1 : index
    %c2_109 = arith.constant 2 : index
    %248 = memref.load %arg5[%c1_108, %c2_109] : memref<4x8xf32, #tpu.memory_space<smem>>
    %249 = vector.broadcast %248 : f32 to vector<2x128xf32>
    %250 = arith.mulf %249, %81 : vector<2x128xf32>
    %251 = arith.addf %247, %250 : vector<2x128xf32>
    %c1_110 = arith.constant 1 : index
    %c3_111 = arith.constant 3 : index
    %252 = memref.load %arg5[%c1_110, %c3_111] : memref<4x8xf32, #tpu.memory_space<smem>>
    %253 = vector.broadcast %252 : f32 to vector<2x128xf32>
    %254 = arith.mulf %253, %106 : vector<2x128xf32>
    %255 = arith.addf %251, %254 : vector<2x128xf32>
    %c1_112 = arith.constant 1 : index
    %c4_113 = arith.constant 4 : index
    %256 = memref.load %arg5[%c1_112, %c4_113] : memref<4x8xf32, #tpu.memory_space<smem>>
    %257 = vector.broadcast %256 : f32 to vector<2x128xf32>
    %258 = arith.mulf %257, %131 : vector<2x128xf32>
    %259 = arith.addf %255, %258 : vector<2x128xf32>
    %c1_114 = arith.constant 1 : index
    %c5_115 = arith.constant 5 : index
    %260 = memref.load %arg5[%c1_114, %c5_115] : memref<4x8xf32, #tpu.memory_space<smem>>
    %261 = vector.broadcast %260 : f32 to vector<2x128xf32>
    %262 = arith.mulf %261, %156 : vector<2x128xf32>
    %263 = arith.addf %259, %262 : vector<2x128xf32>
    %c1_116 = arith.constant 1 : index
    %c6_117 = arith.constant 6 : index
    %264 = memref.load %arg5[%c1_116, %c6_117] : memref<4x8xf32, #tpu.memory_space<smem>>
    %265 = vector.broadcast %264 : f32 to vector<2x128xf32>
    %266 = arith.mulf %265, %181 : vector<2x128xf32>
    %267 = arith.addf %263, %266 : vector<2x128xf32>
    %c1_118 = arith.constant 1 : index
    %c7_119 = arith.constant 7 : index
    %268 = memref.load %arg5[%c1_118, %c7_119] : memref<4x8xf32, #tpu.memory_space<smem>>
    %269 = vector.broadcast %268 : f32 to vector<2x128xf32>
    %270 = arith.mulf %269, %206 : vector<2x128xf32>
    %271 = arith.addf %267, %270 : vector<2x128xf32>
    %c1_120 = arith.constant 1 : index
    %272 = memref.load %arg6[%c1_120] : memref<4xf32, #tpu.memory_space<smem>>
    %273 = vector.broadcast %272 : f32 to vector<2x128xf32>
    %274 = arith.addf %271, %273 : vector<2x128xf32>
    %c2_121 = arith.constant 2 : index
    %c0_122 = arith.constant 0 : index
    %275 = memref.load %arg5[%c2_121, %c0_122] : memref<4x8xf32, #tpu.memory_space<smem>>
    %276 = vector.broadcast %275 : f32 to vector<2x128xf32>
    %277 = arith.mulf %276, %31 : vector<2x128xf32>
    %c2_123 = arith.constant 2 : index
    %c1_124 = arith.constant 1 : index
    %278 = memref.load %arg5[%c2_123, %c1_124] : memref<4x8xf32, #tpu.memory_space<smem>>
    %279 = vector.broadcast %278 : f32 to vector<2x128xf32>
    %280 = arith.mulf %279, %56 : vector<2x128xf32>
    %281 = arith.addf %277, %280 : vector<2x128xf32>
    %c2_125 = arith.constant 2 : index
    %c2_126 = arith.constant 2 : index
    %282 = memref.load %arg5[%c2_125, %c2_126] : memref<4x8xf32, #tpu.memory_space<smem>>
    %283 = vector.broadcast %282 : f32 to vector<2x128xf32>
    %284 = arith.mulf %283, %81 : vector<2x128xf32>
    %285 = arith.addf %281, %284 : vector<2x128xf32>
    %c2_127 = arith.constant 2 : index
    %c3_128 = arith.constant 3 : index
    %286 = memref.load %arg5[%c2_127, %c3_128] : memref<4x8xf32, #tpu.memory_space<smem>>
    %287 = vector.broadcast %286 : f32 to vector<2x128xf32>
    %288 = arith.mulf %287, %106 : vector<2x128xf32>
    %289 = arith.addf %285, %288 : vector<2x128xf32>
    %c2_129 = arith.constant 2 : index
    %c4_130 = arith.constant 4 : index
    %290 = memref.load %arg5[%c2_129, %c4_130] : memref<4x8xf32, #tpu.memory_space<smem>>
    %291 = vector.broadcast %290 : f32 to vector<2x128xf32>
    %292 = arith.mulf %291, %131 : vector<2x128xf32>
    %293 = arith.addf %289, %292 : vector<2x128xf32>
    %c2_131 = arith.constant 2 : index
    %c5_132 = arith.constant 5 : index
    %294 = memref.load %arg5[%c2_131, %c5_132] : memref<4x8xf32, #tpu.memory_space<smem>>
    %295 = vector.broadcast %294 : f32 to vector<2x128xf32>
    %296 = arith.mulf %295, %156 : vector<2x128xf32>
    %297 = arith.addf %293, %296 : vector<2x128xf32>
    %c2_133 = arith.constant 2 : index
    %c6_134 = arith.constant 6 : index
    %298 = memref.load %arg5[%c2_133, %c6_134] : memref<4x8xf32, #tpu.memory_space<smem>>
    %299 = vector.broadcast %298 : f32 to vector<2x128xf32>
    %300 = arith.mulf %299, %181 : vector<2x128xf32>
    %301 = arith.addf %297, %300 : vector<2x128xf32>
    %c2_135 = arith.constant 2 : index
    %c7_136 = arith.constant 7 : index
    %302 = memref.load %arg5[%c2_135, %c7_136] : memref<4x8xf32, #tpu.memory_space<smem>>
    %303 = vector.broadcast %302 : f32 to vector<2x128xf32>
    %304 = arith.mulf %303, %206 : vector<2x128xf32>
    %305 = arith.addf %301, %304 : vector<2x128xf32>
    %c2_137 = arith.constant 2 : index
    %306 = memref.load %arg6[%c2_137] : memref<4xf32, #tpu.memory_space<smem>>
    %307 = vector.broadcast %306 : f32 to vector<2x128xf32>
    %308 = arith.addf %305, %307 : vector<2x128xf32>
    %c3_138 = arith.constant 3 : index
    %c0_139 = arith.constant 0 : index
    %309 = memref.load %arg5[%c3_138, %c0_139] : memref<4x8xf32, #tpu.memory_space<smem>>
    %310 = vector.broadcast %309 : f32 to vector<2x128xf32>
    %311 = arith.mulf %310, %31 : vector<2x128xf32>
    %c3_140 = arith.constant 3 : index
    %c1_141 = arith.constant 1 : index
    %312 = memref.load %arg5[%c3_140, %c1_141] : memref<4x8xf32, #tpu.memory_space<smem>>
    %313 = vector.broadcast %312 : f32 to vector<2x128xf32>
    %314 = arith.mulf %313, %56 : vector<2x128xf32>
    %315 = arith.addf %311, %314 : vector<2x128xf32>
    %c3_142 = arith.constant 3 : index
    %c2_143 = arith.constant 2 : index
    %316 = memref.load %arg5[%c3_142, %c2_143] : memref<4x8xf32, #tpu.memory_space<smem>>
    %317 = vector.broadcast %316 : f32 to vector<2x128xf32>
    %318 = arith.mulf %317, %81 : vector<2x128xf32>
    %319 = arith.addf %315, %318 : vector<2x128xf32>
    %c3_144 = arith.constant 3 : index
    %c3_145 = arith.constant 3 : index
    %320 = memref.load %arg5[%c3_144, %c3_145] : memref<4x8xf32, #tpu.memory_space<smem>>
    %321 = vector.broadcast %320 : f32 to vector<2x128xf32>
    %322 = arith.mulf %321, %106 : vector<2x128xf32>
    %323 = arith.addf %319, %322 : vector<2x128xf32>
    %c3_146 = arith.constant 3 : index
    %c4_147 = arith.constant 4 : index
    %324 = memref.load %arg5[%c3_146, %c4_147] : memref<4x8xf32, #tpu.memory_space<smem>>
    %325 = vector.broadcast %324 : f32 to vector<2x128xf32>
    %326 = arith.mulf %325, %131 : vector<2x128xf32>
    %327 = arith.addf %323, %326 : vector<2x128xf32>
    %c3_148 = arith.constant 3 : index
    %c5_149 = arith.constant 5 : index
    %328 = memref.load %arg5[%c3_148, %c5_149] : memref<4x8xf32, #tpu.memory_space<smem>>
    %329 = vector.broadcast %328 : f32 to vector<2x128xf32>
    %330 = arith.mulf %329, %156 : vector<2x128xf32>
    %331 = arith.addf %327, %330 : vector<2x128xf32>
    %c3_150 = arith.constant 3 : index
    %c6_151 = arith.constant 6 : index
    %332 = memref.load %arg5[%c3_150, %c6_151] : memref<4x8xf32, #tpu.memory_space<smem>>
    %333 = vector.broadcast %332 : f32 to vector<2x128xf32>
    %334 = arith.mulf %333, %181 : vector<2x128xf32>
    %335 = arith.addf %331, %334 : vector<2x128xf32>
    %c3_152 = arith.constant 3 : index
    %c7_153 = arith.constant 7 : index
    %336 = memref.load %arg5[%c3_152, %c7_153] : memref<4x8xf32, #tpu.memory_space<smem>>
    %337 = vector.broadcast %336 : f32 to vector<2x128xf32>
    %338 = arith.mulf %337, %206 : vector<2x128xf32>
    %339 = arith.addf %335, %338 : vector<2x128xf32>
    %c3_154 = arith.constant 3 : index
    %340 = memref.load %arg6[%c3_154] : memref<4xf32, #tpu.memory_space<smem>>
    %341 = vector.broadcast %340 : f32 to vector<2x128xf32>
    %342 = arith.addf %339, %341 : vector<2x128xf32>
    %343 = tpu.concatenate %240, %274, %308, %342 in 0 : vector<2x128xf32>, vector<2x128xf32>, vector<2x128xf32>, vector<2x128xf32> -> vector<8x128xf32>
    %c0_155 = arith.constant 0 : index
    %c0_156 = arith.constant 0 : index
    %344 = vector.load %arg7[%c0_155, %c0_156] : memref<8x128xf32, #tpu.memory_space<vmem>>, vector<8x128xf32>
    tpu.vector_store %arg7[%c0_155, %c0_156], %343 {strides = array<i32>} : memref<8x128xf32, #tpu.memory_space<vmem>>, vector<8x128xf32>,
    return
  }
  func.func @transform_0(%arg0: i32) -> (i32, i32, i32) {
    %c0_i32 = arith.constant 0 : i32
    %c0_i32_0 = arith.constant 0 : i32
    %c0_i32_1 = arith.constant 0 : i32
    %c0_i32_2 = arith.constant 0 : i32
    return %c0_i32, %c0_i32_0, %c0_i32_1 : i32, i32, i32
  }
  func.func @transform_1(%arg0: i32) -> (i32, i32, i32) {
    %c0_i32 = arith.constant 0 : i32
    %c0_i32_0 = arith.constant 0 : i32
    %c0_i32_1 = arith.constant 0 : i32
    return %c0_i32, %c0_i32_0, %arg0 : i32, i32, i32
  }
  func.func @transform_2(%arg0: i32) -> (i32, i32) {
    %c0_i32 = arith.constant 0 : i32
    %c0_i32_0 = arith.constant 0 : i32
    %c0_i32_1 = arith.constant 0 : i32
    return %c0_i32, %c0_i32_0 : i32, i32
  }
  func.func @transform_3(%arg0: i32) -> i32 {
    %c0_i32 = arith.constant 0 : i32
    %c0_i32_0 = arith.constant 0 : i32
    return %c0_i32 : i32
  }
  func.func @transform_4(%arg0: i32) -> (i32, i32) {
    %c0_i32 = arith.constant 0 : i32
    %c0_i32_0 = arith.constant 0 : i32
    %c0_i32_1 = arith.constant 0 : i32
    return %c0_i32, %c0_i32_0 : i32, i32
  }
  func.func @transform_5(%arg0: i32) -> i32 {
    %c0_i32 = arith.constant 0 : i32
    %c0_i32_0 = arith.constant 0 : i32
    return %c0_i32 : i32
  }
  func.func @transform_6(%arg0: i32) -> (i32, i32) {
    %c0_i32 = arith.constant 0 : i32
    %c0_i32_0 = arith.constant 0 : i32
    return %c0_i32, %arg0 : i32, i32
  }
}

</mosaic_0001>

<llo_original>
// kernel: tpu_custom_call.1
$region0: #{tpu_custom_call.1}
  #allocation0 [shape = 'u32[]', space=smem, size = 0x4, offset = 0x4, fixed_abs, tag = 'smem constant byte address 0x4 - core index']
  #allocation1 [shape = 'u32[144,128]{1,0:T(1,128)}', space=vmem, size = 0x12000, scoped, tag = 'internal scratch']
  %s0 = inlined_call_operand.hbm [shape: bf16[4,8,64], index: 0, kind: input, shape index: {}]
  %s1 = inlined_call_operand.hbm [shape: bf16[4,64,256], index: 1, kind: input, shape index: {}]
  %s2 = inlined_call_operand.vmem [shape: f32[8,4], index: 2, kind: input, shape index: {}]
  %s3 = inlined_call_operand.vmem [shape: f32[8], index: 3, kind: input, shape index: {}]
  %s4 = inlined_call_operand.vmem [shape: f32[4,8], index: 4, kind: input, shape index: {}]
  %s5 = inlined_call_operand.vmem [shape: f32[4], index: 5, kind: input, shape index: {}]
  %s6 = inlined_call_operand.hbm [shape: f32[8,256], index: 6, kind: output, shape index: {}]
  %s7 = sld [smem:[#allocation0]]
  $region81: #{tpu_custom_call.1} parent=0
    _
  %s9 = ssub.s32 1, %s7
  %s10 = scalar_select 0, %s9, %s7
  $region1: #{tpu_custom_call.1} parent=0
    #allocation2 [shape = 'u8[8192]{0}', space=vmem, size = 0x2000, scoped, tag = 'input window, operand 0, single buffered']
    #allocation3 [shape = 's32[2]{0}', space=sflag, size = 0x8, scoped, tag = 'scoped memory for tpu_custom_call.1']
    #allocation4 [shape = 's32[2]{0}', space=sflag, size = 0x8, scoped, tag = 'scoped memory for tpu_custom_call.1']
    #allocation5 [shape = 's32[2]{0}', space=sflag, size = 0x8, scoped, tag = 'scoped memory for tpu_custom_call.1']
    #allocation6 [shape = 'u8[131072]{0}', space=vmem, size = 0x20000, scoped, tag = 'input window, operand 1']
    #allocation7 [shape = 's32[2]{0}', space=sflag, size = 0x8, scoped, tag = 'scoped memory for tpu_custom_call.1']
    #allocation8 [shape = 'u8[4096]{0}', space=smem, size = 0x1000, scoped, tag = 'input window, operand 2, single buffered']
    #allocation9 [shape = 'u8[512]{0}', space=smem, size = 0x200, scoped, tag = 'input window, operand 3, single buffered']
    #allocation10 [shape = 's32[1]{0}', space=sflag, size = 0x4, scoped, tag = 'scoped memory for tpu_custom_call.1']
    #allocation11 [shape = 'u8[2048]{0}', space=smem, size = 0x800, scoped, tag = 'input window, operand 4, single buffered']
    #allocation12 [shape = 'u8[512]{0}', space=smem, size = 0x200, scoped, tag = 'input window, operand 5, single buffered']
    #allocation13 [shape = 's32[1]{0}', space=sflag, size = 0x4, scoped, tag = 'scoped memory for tpu_custom_call.1']
    #allocation14 [shape = 'u8[8192]{0}', space=vmem, size = 0x2000, scoped, tag = 'output window, operand 0']
    %11 = vsyncpa [#allocation3], 0
    %12 = vsyncpa [#allocation7], 0
    %s13 = scalar_lea.sflag [#allocation7], 1
    %14 = vsyncpa %s13, 0
    %15 = vsyncpa [#allocation5], 0
    %16 = vsyncpa [#allocation10], 0
    %17 = vsyncpa [#allocation13], 0
    %18 = vsyncpa [#allocation4], 0
    %s19 = scalar_lea.sflag [#allocation4], 1
    %20 = vsyncpa %s19, 0
    loop: start=0, step=1, limit=4
    $region2: #{tpu_custom_call.1} parent=1 // loop_pre_header
      _
    $region3: #{tpu_custom_call.1} parent=1 // loop_header
      %s22 = sphi 0, %s26
      %p23 = scmp.ge.s32.totalorder %s22, 4
      %s30 = sphi 0, %s30
      %s32 = sphi 0, %s30
      %s33 = sphi 0, %s32
      %s47 = sphi 0, %s33
      %s53 = sphi 0, %s55
      %s56 = sphi 0, %s53
      %s57 = sphi 0, %s56
      %s73 = sphi 0, %s57
      %s77 = sphi 0, %s77
      %s79 = sphi 0, %s77
      %s80 = sphi 0, %s79
      %s94 = sphi 0, %s80
      %s98 = sphi 0, %s98
      %s100 = sphi 0, %s98
      %s101 = sphi 0, %s100
      %s115 = sphi 0, %s101
      %s119 = sphi 0, %s119
      %s121 = sphi 0, %s119
      %s122 = sphi 0, %s121
      %s136 = sphi 0, %s122
      %s140 = sphi 0, %s140
      %s142 = sphi 0, %s140
      %s143 = sphi 0, %s142
      %s157 = sphi 0, %s143
      %s163 = sphi 0, %s165
      %s166 = sphi 0, %s163
      %s167 = sphi 0, %s166
      %s183 = sphi 0, %s167
    $region4: #{tpu_custom_call.1} parent=1 // loop_header_branch
      %25 = sbr.rel (%p23) target = $region8
    $region5: #{tpu_custom_call.1} parent=1 // loop_body
      %s27 = ssub.s32 %s22, 1
      %s28 = ssub.s32 %s22, 2
      %s29 = sadd.s32 %s22, 1
      %s31 = sadd.s32 %s30, 1
      %p34 = scmp.eq.s32.totalorder %s22, 1
      %p35 = scmp.ne.s32.totalorder %s30, %s32
      %p36 = scmp.eq.s32.totalorder %s22, 0
      %p37 = por %p35, %p36
      %p38 = scmp.ne.s32.totalorder %s30, %s32
      %p39 = scmp.eq.s32.totalorder %s27, 1
      %p40 = por %p38, %p39
      %p41 = scmp.ne.s32.totalorder %s32, %s33
      %p42 = scmp.eq.s32.totalorder %s27, 0
      %p43 = por %p41, %p42
      %p44 = scmp.ne.s32.totalorder %s32, %s33
      %p45 = scmp.eq.s32.totalorder %s28, 1
      %p46 = por %p44, %p45
      %p48 = scmp.ne.s32.totalorder %s33, %s47
      %p49 = scmp.eq.s32.totalorder %s28, 0
      %p50 = por %p48, %p49
      %s51 = ssub.s32 %s22, %s29
      %p52 = scmp.eq.s32.totalorder %s51, 0
      %s54 = sadd.s32 %s53, 1
      %s55 = scalar_select %p52, %s53, %s54
      %p58 = pneg %p52
      %p59 = scmp.eq.s32.totalorder %s22, 1
      %p60 = por %p58, %p59
      %p61 = scmp.ne.s32.totalorder %s53, %s56
      %p62 = scmp.eq.s32.totalorder %s22, 0
      %p63 = por %p61, %p62
      %p64 = scmp.ne.s32.totalorder %s53, %s56
      %p65 = scmp.eq.s32.totalorder %s27, 1
      %p66 = por %p64, %p65
      %p67 = scmp.ne.s32.totalorder %s56, %s57
      %p68 = scmp.eq.s32.totalorder %s27, 0
      %p69 = por %p67, %p68
      %p70 = scmp.ne.s32.totalorder %s56, %s57
      %p71 = scmp.eq.s32.totalorder %s28, 1
      %p72 = por %p70, %p71
      %p74 = scmp.ne.s32.totalorder %s57, %s73
      %p75 = scmp.eq.s32.totalorder %s28, 0
      %p76 = por %p74, %p75
      %s78 = sadd.s32 %s77, 1
      %p81 = scmp.eq.s32.totalorder %s22, 1
      %p82 = scmp.ne.s32.totalorder %s77, %s79
      %p83 = scmp.eq.s32.totalorder %s22, 0
      %p84 = por %p82, %p83
      %p85 = scmp.ne.s32.totalorder %s77, %s79
      %p86 = scmp.eq.s32.totalorder %s27, 1
      %p87 = por %p85, %p86
      %p88 = scmp.ne.s32.totalorder %s79, %s80
      %p89 = scmp.eq.s32.totalorder %s27, 0
      %p90 = por %p88, %p89
      %p91 = scmp.ne.s32.totalorder %s79, %s80
      %p92 = scmp.eq.s32.totalorder %s28, 1
      %p93 = por %p91, %p92
      %p95 = scmp.ne.s32.totalorder %s80, %s94
      %p96 = scmp.eq.s32.totalorder %s28, 0
      %p97 = por %p95, %p96
      %s99 = sadd.s32 %s98, 1
      %p102 = scmp.eq.s32.totalorder %s22, 1
      %p103 = scmp.ne.s32.totalorder %s98, %s100
      %p104 = scmp.eq.s32.totalorder %s22, 0
      %p105 = por %p103, %p104
      %p106 = scmp.ne.s32.totalorder %s98, %s100
      %p107 = scmp.eq.s32.totalorder %s27, 1
      %p108 = por %p106, %p107
      %p109 = scmp.ne.s32.totalorder %s100, %s101
      %p110 = scmp.eq.s32.totalorder %s27, 0
      %p111 = por %p109, %p110
      %p112 = scmp.ne.s32.totalorder %s100, %s101
      %p113 = scmp.eq.s32.totalorder %s28, 1
      %p114 = por %p112, %p113
      %p116 = scmp.ne.s32.totalorder %s101, %s115
      %p117 = scmp.eq.s32.totalorder %s28, 0
      %p118 = por %p116, %p117
      %s120 = sadd.s32 %s119, 1
      %p123 = scmp.eq.s32.totalorder %s22, 1
      %p124 = scmp.ne.s32.totalorder %s119, %s121
      %p125 = scmp.eq.s32.totalorder %s22, 0
      %p126 = por %p124, %p125
      %p127 = scmp.ne.s32.totalorder %s119, %s121
      %p128 = scmp.eq.s32.totalorder %s27, 1
      %p129 = por %p127, %p128
      %p130 = scmp.ne.s32.totalorder %s121, %s122
      %p131 = scmp.eq.s32.totalorder %s27, 0
      %p132 = por %p130, %p131
      %p133 = scmp.ne.s32.totalorder %s121, %s122
      %p134 = scmp.eq.s32.totalorder %s28, 1
      %p135 = por %p133, %p134
      %p137 = scmp.ne.s32.totalorder %s122, %s136
      %p138 = scmp.eq.s32.totalorder %s28, 0
      %p139 = por %p137, %p138
      %s141 = sadd.s32 %s140, 1
      %p144 = scmp.eq.s32.totalorder %s22, 1
      %p145 = scmp.ne.s32.totalorder %s140, %s142
      %p146 = scmp.eq.s32.totalorder %s22, 0
      %p147 = por %p145, %p146
      %p148 = scmp.ne.s32.totalorder %s140, %s142
      %p149 = scmp.eq.s32.totalorder %s27, 1
      %p150 = por %p148, %p149
      %p151 = scmp.ne.s32.totalorder %s142, %s143
      %p152 = scmp.eq.s32.totalorder %s27, 0
      %p153 = por %p151, %p152
      %p154 = scmp.ne.s32.totalorder %s142, %s143
      %p155 = scmp.eq.s32.totalorder %s28, 1
      %p156 = por %p154, %p155
      %p158 = scmp.ne.s32.totalorder %s143, %s157
      %p159 = scmp.eq.s32.totalorder %s28, 0
      %p160 = por %p158, %p159
      %s161 = ssub.s32 %s22, %s29
      %p162 = scmp.eq.s32.totalorder %s161, 0
      %s164 = sadd.s32 %s163, 1
      %s165 = scalar_select %p162, %s163, %s164
      %p168 = pneg %p162
      %p169 = scmp.eq.s32.totalorder %s22, 1
      %p170 = por %p168, %p169
      %p171 = scmp.ne.s32.totalorder %s163, %s166
      %p172 = scmp.eq.s32.totalorder %s22, 0
      %p173 = por %p171, %p172
      %p174 = scmp.ne.s32.totalorder %s163, %s166
      %p175 = scmp.eq.s32.totalorder %s27, 1
      %p176 = por %p174, %p175
      %p177 = scmp.ne.s32.totalorder %s166, %s167
      %p178 = scmp.eq.s32.totalorder %s27, 0
      %p179 = por %p177, %p178
      %p180 = scmp.ne.s32.totalorder %s166, %s167
      %p181 = scmp.eq.s32.totalorder %s28, 1
      %p182 = por %p180, %p181
      %p184 = scmp.ne.s32.totalorder %s167, %s183
      %p185 = scmp.eq.s32.totalorder %s28, 0
      %p186 = por %p184, %p185
      %p187 = scmp.le.s32.totalorder 1, %s22
      %p188 = scmp.lt.s32.totalorder %s22, 3
      %p189 = pnand %p187, %p188
      %p190 = pneg %p189
      // Predicated region
      $region9: #{tpu_custom_call.1} parent=5 // pred_check
        _
      $region10: #{tpu_custom_call.1} parent=5 // pred_check_branch
        %192 = sbr.rel (%p189) target = $region12
      $region11: #{tpu_custom_call.1} parent=5 // pred_region
        %s193 = ssub.s32 %s22, 1
        // Predicated region
        $region13: #{tpu_custom_call.1} parent=11 // pred_check
          %p194 = pneg %p43
        $region14: #{tpu_custom_call.1} parent=11 // pred_check_branch
          %196 = sbr.rel (%p194) target = $region16
        $region15: #{tpu_custom_call.1} parent=11 // pred_region
          %s198 = ssub.s32 256, 256
          %199 = vsyncadd [#allocation3], %s198
          %s200 = sshll.u32 [#allocation2], 4
          %s201 = int_to_ptr.vmem [resolvable:$true] %s200
          %206 = dma.hbm_to_vmem [thread:$0]  %s0, 256, %s201, [#allocation3], 64, 64, 4
        $region16: #{tpu_custom_call.1} parent=11 // pred_fallthru
          _
        // Predicated region
        $region17: #{tpu_custom_call.1} parent=11 // pred_check
          %p207 = pneg %p90
        $region18: #{tpu_custom_call.1} parent=11 // pred_check_branch
          %209 = sbr.rel (%p207) target = $region20
        $region19: #{tpu_custom_call.1} parent=11 // pred_region
          %s211 = ssub.s32 128, 128
          %212 = vsyncadd [#allocation5], %s211
          %s214 = sshll.u32 %s2, 4
          %s215 = int_to_ptr.vmem [resolvable:$true] %s214
          %217 = dma.vmem_to_smem %s215, 128, [#allocation8], [#allocation5]
        $region20: #{tpu_custom_call.1} parent=11 // pred_fallthru
          _
        // Predicated region
        $region21: #{tpu_custom_call.1} parent=11 // pred_check
          %p218 = pneg %p111
        $region22: #{tpu_custom_call.1} parent=11 // pred_check_branch
          %220 = sbr.rel (%p218) target = $region24
        $region23: #{tpu_custom_call.1} parent=11 // pred_region
          %s222 = ssub.s32 16, 16
          %223 = vsyncadd [#allocation10], %s222
          %s225 = sshll.u32 %s3, 4
          %s226 = int_to_ptr.vmem [resolvable:$true] %s225
          %228 = dma.vmem_to_smem %s226, 16, [#allocation9], [#allocation10]
        $region24: #{tpu_custom_call.1} parent=11 // pred_fallthru
          _
        // Predicated region
        $region25: #{tpu_custom_call.1} parent=11 // pred_check
          %p229 = pneg %p132
        $region26: #{tpu_custom_call.1} parent=11 // pred_check_branch
          %231 = sbr.rel (%p229) target = $region28
        $region27: #{tpu_custom_call.1} parent=11 // pred_region
          %s233 = ssub.s32 64, 64
          %234 = vsyncadd [#allocation10], %s233
          %s236 = sshll.u32 %s4, 4
          %s237 = int_to_ptr.vmem [resolvable:$true] %s236
          %239 = dma.vmem_to_smem %s237, 64, [#allocation11], [#allocation10]
        $region28: #{tpu_custom_call.1} parent=11 // pred_fallthru
          _
        // Predicated region
        $region29: #{tpu_custom_call.1} parent=11 // pred_check
          %p240 = pneg %p153
        $region30: #{tpu_custom_call.1} parent=11 // pred_check_branch
          %242 = sbr.rel (%p240) target = $region32
        $region31: #{tpu_custom_call.1} parent=11 // pred_region
          %s244 = ssub.s32 16, 16
          %245 = vsyncadd [#allocation13], %s244
          %s247 = sshll.u32 %s5, 4
          %s248 = int_to_ptr.vmem [resolvable:$true] %s247
          %250 = dma.vmem_to_smem %s248, 16, [#allocation12], [#allocation13]
        $region32: #{tpu_custom_call.1} parent=11 // pred_fallthru
          _
      $region12: #{tpu_custom_call.1} parent=5 // pred_fallthru
        _
      %p251 = scmp.lt.s32.totalorder %s22, 2
      // Predicated region
      $region33: #{tpu_custom_call.1} parent=5 // pred_check
        %p252 = pneg %p251
      $region34: #{tpu_custom_call.1} parent=5 // pred_check_branch
        %254 = sbr.rel (%p252) target = $region36
      $region35: #{tpu_custom_call.1} parent=5 // pred_region
        // Predicated region
        $region37: #{tpu_custom_call.1} parent=35 // pred_check
          %p255 = pneg %p63
        $region38: #{tpu_custom_call.1} parent=35 // pred_check_branch
          %257 = sbr.rel (%p255) target = $region40
        $region39: #{tpu_custom_call.1} parent=35 // pred_region
          %s258 = sand.u32 %s53, 1
          %s259 = scalar_lea.sflag [#allocation7], %s258
          %s260 = sand.u32 %s53, 1
          %s261 = smul.addr %s260, 128
          %s262 = scalar_lea.vmem [#allocation6], %s261
          %s264 = ssub.s32 2048, 2048
          %265 = vsyncadd %s259, %s264
          %s266 = smul.addr %s22, 64
          %s267 = scalar_lea.hbm %s1, %s266
          %s268 = sshll.u32 %s262, 4
          %s269 = int_to_ptr.vmem [resolvable:$true] %s268
          %274 = dma.hbm_to_vmem [thread:$0]  %s267, 2048, %s269, %s259, 128, 64, 4
        $region40: #{tpu_custom_call.1} parent=35 // pred_fallthru
          _
      $region36: #{tpu_custom_call.1} parent=5 // pred_fallthru
        _
      %p275 = scmp.le.s32.totalorder 1, %s22
      %p276 = scmp.lt.s32.totalorder %s22, 3
      %p277 = pnand %p275, %p276
      %p278 = pneg %p277
      // Predicated region
      $region41: #{tpu_custom_call.1} parent=5 // pred_check
        _
      $region42: #{tpu_custom_call.1} parent=5 // pred_check_branch
        %280 = sbr.rel (%p277) target = $region44
      $region43: #{tpu_custom_call.1} parent=5 // pred_region
        %s281 = ssub.s32 %s22, 1
        // Predicated region
        $region45: #{tpu_custom_call.1} parent=43 // pred_check
          %p282 = pneg %p43
        $region46: #{tpu_custom_call.1} parent=43 // pred_check_branch
          %284 = sbr.rel (%p282) target = $region48
        $region47: #{tpu_custom_call.1} parent=43 // pred_region
          %285 = dma.done [#allocation3], 256
        $region48: #{tpu_custom_call.1} parent=43 // pred_fallthru
          _
        %s286 = sand.u32 %s56, 1
        %s287 = scalar_lea.sflag [#allocation7], %s286
        %s288 = sand.u32 %s56, 1
        %s289 = smul.addr %s288, 128
        %s290 = scalar_lea.vmem [#allocation6], %s289
        // Predicated region
        $region49: #{tpu_custom_call.1} parent=43 // pred_check
          %p291 = pneg %p69
        $region50: #{tpu_custom_call.1} parent=43 // pred_check_branch
          %293 = sbr.rel (%p291) target = $region52
        $region51: #{tpu_custom_call.1} parent=43 // pred_region
          %294 = dma.done %s287, 2048
        $region52: #{tpu_custom_call.1} parent=43 // pred_fallthru
          _
        // Predicated region
        $region53: #{tpu_custom_call.1} parent=43 // pred_check
          %p295 = pneg %p90
        $region54: #{tpu_custom_call.1} parent=43 // pred_check_branch
          %297 = sbr.rel (%p295) target = $region56
        $region55: #{tpu_custom_call.1} parent=43 // pred_region
          %298 = dma.done [#allocation5], 128
        $region56: #{tpu_custom_call.1} parent=43 // pred_fallthru
          _
        // Predicated region
        $region57: #{tpu_custom_call.1} parent=43 // pred_check
          %p299 = pneg %p111
        $region58: #{tpu_custom_call.1} parent=43 // pred_check_branch
          %301 = sbr.rel (%p299) target = $region60
        $region59: #{tpu_custom_call.1} parent=43 // pred_region
          %302 = dma.done [#allocation10], 16
        $region60: #{tpu_custom_call.1} parent=43 // pred_fallthru
          _
        // Predicated region
        $region61: #{tpu_custom_call.1} parent=43 // pred_check
          %p303 = pneg %p132
        $region62: #{tpu_custom_call.1} parent=43 // pred_check_branch
          %305 = sbr.rel (%p303) target = $region64
        $region63: #{tpu_custom_call.1} parent=43 // pred_region
          %306 = dma.done [#allocation10], 64
        $region64: #{tpu_custom_call.1} parent=43 // pred_fallthru
          _
        // Predicated region
        $region65: #{tpu_custom_call.1} parent=43 // pred_check
          %p307 = pneg %p153
        $region66: #{tpu_custom_call.1} parent=43 // pred_check_branch
          %309 = sbr.rel (%p307) target = $region68
        $region67: #{tpu_custom_call.1} parent=43 // pred_region
          %310 = dma.done [#allocation13], 16
        $region68: #{tpu_custom_call.1} parent=43 // pred_fallthru
          _
        %311 = sfence
        %p312 = pneg %p43
        %p313 = pneg %p40
        %s314 = sand.u32 %s56, 1
        %s315 = scalar_lea.sflag [#allocation7], %s314
        %s316 = sand.u32 %s56, 1
        %s317 = smul.addr %s316, 128
        %s318 = scalar_lea.vmem [#allocation6], %s317
        %p319 = pneg %p69
        %p320 = pneg %p66
        %p321 = pneg %p90
        %p322 = pneg %p87
        %p323 = pneg %p111
        %p324 = pneg %p108
        %p325 = pneg %p132
        %p326 = pneg %p129
        %p327 = pneg %p153
        %p328 = pneg %p150
        %p329 = pneg %p179
        %p330 = pneg %p176
        %s331 = sand.u32 %s166, 1
        %s332 = scalar_lea.sflag [#allocation4], %s331
        %s333 = sand.u32 %s166, 1
        %s334 = smul.addr %s333, 8
        %s335 = scalar_lea.vmem [#allocation14], %s334
        %v337 = vld [vmem:[#allocation2] sm:$0xf]
        %v338 = vld [vmem:[#allocation2 + $0x4] sm:$0xf]
        %v339 = vld [vmem:[#allocation2 + $0x8] sm:$0xf]
        %v340 = vld [vmem:[#allocation2 + $0xc] sm:$0xf]
        %v341 = vld [vmem:[%s290] sm:$0xf]
        %v342 = vld [vmem:[%s290 + $0x4] sm:$0xf]
        %v343 = vld [vmem:[%s290 + $0x8] sm:$0xf]
        %v344 = vld [vmem:[%s290 + $0xc] sm:$0xf]
        %v345 = vld [vmem:[%s290 + $0x10] sm:$0xf]
        %v346 = vld [vmem:[%s290 + $0x14] sm:$0xf]
        %v347 = vld [vmem:[%s290 + $0x18] sm:$0xf]
        %v348 = vld [vmem:[%s290 + $0x1c] sm:$0xf]
        %v349 = vld [vmem:[%s290 + $0x20] sm:$0xf]
        %v350 = vld [vmem:[%s290 + $0x24] sm:$0xf]
        %v351 = vld [vmem:[%s290 + $0x28] sm:$0xf]
        %v352 = vld [vmem:[%s290 + $0x2c] sm:$0xf]
        %v353 = vld [vmem:[%s290 + $0x30] sm:$0xf]
        %v354 = vld [vmem:[%s290 + $0x34] sm:$0xf]
        %v355 = vld [vmem:[%s290 + $0x38] sm:$0xf]
        %v356 = vld [vmem:[%s290 + $0x3c] sm:$0xf]
        %v357 = vld [vmem:[%s290 + $0x40] sm:$0xf]
        %v358 = vld [vmem:[%s290 + $0x44] sm:$0xf]
        %v359 = vld [vmem:[%s290 + $0x48] sm:$0xf]
        %v360 = vld [vmem:[%s290 + $0x4c] sm:$0xf]
        %v361 = vld [vmem:[%s290 + $0x50] sm:$0xf]
        %v362 = vld [vmem:[%s290 + $0x54] sm:$0xf]
        %v363 = vld [vmem:[%s290 + $0x58] sm:$0xf]
        %v364 = vld [vmem:[%s290 + $0x5c] sm:$0xf]
        %v365 = vld [vmem:[%s290 + $0x60] sm:$0xf]
        %v366 = vld [vmem:[%s290 + $0x64] sm:$0xf]
        %v367 = vld [vmem:[%s290 + $0x68] sm:$0xf]
        %v368 = vld [vmem:[%s290 + $0x6c] sm:$0xf]
        %v369 = vld [vmem:[%s290 + $0x70] sm:$0xf]
        %v370 = vld [vmem:[%s290 + $0x74] sm:$0xf]
        %v371 = vld [vmem:[%s290 + $0x78] sm:$0xf]
        %v372 = vld [vmem:[%s290 + $0x7c] sm:$0xf]
        %v381 = vunpack.c.l.b16 %v341
        %v382 = vunpack.c.l.b16 %v342
        %v383 = vunpack.c.l.b16 %v343
        %v384 = vunpack.c.l.b16 %v344
        %v385 = vunpack.c.l.b16 %v345
        %v386 = vunpack.c.l.b16 %v346
        %v387 = vunpack.c.l.b16 %v347
        %v388 = vunpack.c.l.b16 %v348
        %v389 = vpack.c.b16 %v382, %v381
        %v390 = vpack.c.b16 %v384, %v383
        %v391 = vpack.c.b16 %v386, %v385
        %v392 = vpack.c.b16 %v388, %v387
        %vm397 = vcmask 523264
        %v399 = vsel %vm397, %v337, 0
        %401 = vmatprep.subr.bf16.mxu0 0
        %402 = vmatpush1.bf16.msra.mxu0 0
        %403 = vmatprep.subr.bf16.mxu0 0
        %404 = vmatpush1.bf16.msra.mxu0 0
        %405 = vmatprep.subr.bf16.mxu0 0
        %406 = vmatpush1.bf16.msra.mxu0 0
        %407 = vmatprep.subr.bf16.mxu0 0
        %408 = vmatpush1.bf16.msra.mxu0 0
        %409 = vmatprep.subr.bf16.mxu0 0
        %410 = vmatpush1.bf16.msra.mxu0 %v392
        %411 = vmatprep.subr.bf16.mxu0 0
        %412 = vmatpush1.bf16.msra.mxu0 %v391
        %413 = vmatprep.subr.bf16.mxu0 0
        %414 = vmatpush1.bf16.msra.mxu0 %v390
        %415 = vmatprep.subr.bf16.mxu0 0
        %416 = vmatpush1.bf16.msra.mxu0 %v389
        %417 = vmatprep.subr.bf16.mxu0 0
        %418 = vmatpush2.bf16.msra.mxu0 0
        %419 = vmatprep.subr.bf16.mxu0 0
        %420 = vmatpush2.bf16.msra.mxu0 0
        %421 = vmatprep.subr.bf16.mxu0 0
        %422 = vmatpush2.bf16.msra.mxu0 0
        %423 = vmatprep.subr.bf16.mxu0 0
        %424 = vmatpush2.bf16.msra.mxu0 0
        %425 = vmatprep.subr.bf16.mxu0 0
        %426 = vmatpush2.bf16.msra.mxu0 0
        %427 = vmatprep.subr.bf16.mxu0 0
        %428 = vmatpush2.bf16.msra.mxu0 0
        %429 = vmatprep.subr.bf16.mxu0 0
        %430 = vmatpush2.bf16.msra.mxu0 0
        %431 = vmatprep.subr.bf16.mxu0 0
        %432 = vmatpush2.bf16.msra.mxu0 0
        %433 = vmatprep.mubr.bf16.mxu0 0
        %434 = vmatmul.mubr.bf16.gmra.mxu0 %v399
        %v435 = vpop.f32.mrf.mxu0
        %v436 = vadd.f32 0.0, %v435
        %v437 = vpop.f32.mrf.mxu0
        %v438 = vpop.f32.mrf.mxu0
        %v439 = vpop.f32.mrf.mxu0
        %440 = vdwg.mxu0
        %v449 = vunpack.c.l.b16 %v349
        %v450 = vunpack.c.l.b16 %v350
        %v451 = vunpack.c.l.b16 %v351
        %v452 = vunpack.c.l.b16 %v352
        %v453 = vunpack.c.l.b16 %v353
        %v454 = vunpack.c.l.b16 %v354
        %v455 = vunpack.c.l.b16 %v355
        %v456 = vunpack.c.l.b16 %v356
        %v457 = vpack.c.b16 %v450, %v449
        %v458 = vpack.c.b16 %v452, %v451
        %v459 = vpack.c.b16 %v454, %v453
        %v460 = vpack.c.b16 %v456, %v455
        %v466 = vsel %vm397, %v338, 0
        %468 = vmatprep.subr.bf16.mxu0 0
        %469 = vmatpush1.bf16.msra.mxu0 0
        %470 = vmatprep.subr.bf16.mxu0 0
        %471 = vmatpush1.bf16.msra.mxu0 0
        %472 = vmatprep.subr.bf16.mxu0 0
        %473 = vmatpush1.bf16.msra.mxu0 0
        %474 = vmatprep.subr.bf16.mxu0 0
        %475 = vmatpush1.bf16.msra.mxu0 0
        %476 = vmatprep.subr.bf16.mxu0 0
        %477 = vmatpush1.bf16.msra.mxu0 %v460
        %478 = vmatprep.subr.bf16.mxu0 0
        %479 = vmatpush1.bf16.msra.mxu0 %v459
        %480 = vmatprep.subr.bf16.mxu0 0
        %481 = vmatpush1.bf16.msra.mxu0 %v458
        %482 = vmatprep.subr.bf16.mxu0 0
        %483 = vmatpush1.bf16.msra.mxu0 %v457
        %484 = vmatprep.subr.bf16.mxu0 0
        %485 = vmatpush2.bf16.msra.mxu0 0
        %486 = vmatprep.subr.bf16.mxu0 0
        %487 = vmatpush2.bf16.msra.mxu0 0
        %488 = vmatprep.subr.bf16.mxu0 0
        %489 = vmatpush2.bf16.msra.mxu0 0
        %490 = vmatprep.subr.bf16.mxu0 0
        %491 = vmatpush2.bf16.msra.mxu0 0
        %492 = vmatprep.subr.bf16.mxu0 0
        %493 = vmatpush2.bf16.msra.mxu0 0
        %494 = vmatprep.subr.bf16.mxu0 0
        %495 = vmatpush2.bf16.msra.mxu0 0
        %496 = vmatprep.subr.bf16.mxu0 0
        %497 = vmatpush2.bf16.msra.mxu0 0
        %498 = vmatprep.subr.bf16.mxu0 0
        %499 = vmatpush2.bf16.msra.mxu0 0
        %500 = vmatprep.mubr.bf16.mxu0 0
        %501 = vmatmul.mubr.bf16.gmra.mxu0 %v466
        %v502 = vpop.f32.mrf.mxu0
        %v503 = vadd.f32 0.0, %v502
        %v504 = vpop.f32.mrf.mxu0
        %v505 = vpop.f32.mrf.mxu0
        %v506 = vpop.f32.mrf.mxu0
        %507 = vdwg.mxu0
        %v516 = vunpack.c.l.b16 %v357
        %v517 = vunpack.c.l.b16 %v358
        %v518 = vunpack.c.l.b16 %v359
        %v519 = vunpack.c.l.b16 %v360
        %v520 = vunpack.c.l.b16 %v361
        %v521 = vunpack.c.l.b16 %v362
        %v522 = vunpack.c.l.b16 %v363
        %v523 = vunpack.c.l.b16 %v364
        %v524 = vpack.c.b16 %v517, %v516
        %v525 = vpack.c.b16 %v519, %v518
        %v526 = vpack.c.b16 %v521, %v520
        %v527 = vpack.c.b16 %v523, %v522
        %v533 = vsel %vm397, %v339, 0
        %535 = vmatprep.subr.bf16.mxu0 0
        %536 = vmatpush1.bf16.msra.mxu0 0
        %537 = vmatprep.subr.bf16.mxu0 0
        %538 = vmatpush1.bf16.msra.mxu0 0
        %539 = vmatprep.subr.bf16.mxu0 0
        %540 = vmatpush1.bf16.msra.mxu0 0
        %541 = vmatprep.subr.bf16.mxu0 0
        %542 = vmatpush1.bf16.msra.mxu0 0
        %543 = vmatprep.subr.bf16.mxu0 0
        %544 = vmatpush1.bf16.msra.mxu0 %v527
        %545 = vmatprep.subr.bf16.mxu0 0
        %546 = vmatpush1.bf16.msra.mxu0 %v526
        %547 = vmatprep.subr.bf16.mxu0 0
        %548 = vmatpush1.bf16.msra.mxu0 %v525
        %549 = vmatprep.subr.bf16.mxu0 0
        %550 = vmatpush1.bf16.msra.mxu0 %v524
        %551 = vmatprep.subr.bf16.mxu0 0
        %552 = vmatpush2.bf16.msra.mxu0 0
        %553 = vmatprep.subr.bf16.mxu0 0
        %554 = vmatpush2.bf16.msra.mxu0 0
        %555 = vmatprep.subr.bf16.mxu0 0
        %556 = vmatpush2.bf16.msra.mxu0 0
        %557 = vmatprep.subr.bf16.mxu0 0
        %558 = vmatpush2.bf16.msra.mxu0 0
        %559 = vmatprep.subr.bf16.mxu0 0
        %560 = vmatpush2.bf16.msra.mxu0 0
        %561 = vmatprep.subr.bf16.mxu0 0
        %562 = vmatpush2.bf16.msra.mxu0 0
        %563 = vmatprep.subr.bf16.mxu0 0
        %564 = vmatpush2.bf16.msra.mxu0 0
        %565 = vmatprep.subr.bf16.mxu0 0
        %566 = vmatpush2.bf16.msra.mxu0 0
        %567 = vmatprep.mubr.bf16.mxu0 0
        %568 = vmatmul.mubr.bf16.gmra.mxu0 %v533
        %v569 = vpop.f32.mrf.mxu0
        %v570 = vadd.f32 0.0, %v569
        %v571 = vpop.f32.mrf.mxu0
        %v572 = vpop.f32.mrf.mxu0
        %v573 = vpop.f32.mrf.mxu0
        %574 = vdwg.mxu0
        %v583 = vunpack.c.l.b16 %v365
        %v584 = vunpack.c.l.b16 %v366
        %v585 = vunpack.c.l.b16 %v367
        %v586 = vunpack.c.l.b16 %v368
        %v587 = vunpack.c.l.b16 %v369
        %v588 = vunpack.c.l.b16 %v370
        %v589 = vunpack.c.l.b16 %v371
        %v590 = vunpack.c.l.b16 %v372
        %v591 = vpack.c.b16 %v584, %v583
        %v592 = vpack.c.b16 %v586, %v585
        %v593 = vpack.c.b16 %v588, %v587
        %v594 = vpack.c.b16 %v590, %v589
        %v600 = vsel %vm397, %v340, 0
        %602 = vmatprep.subr.bf16.mxu0 0
        %603 = vmatpush1.bf16.msra.mxu0 0
        %604 = vmatprep.subr.bf16.mxu0 0
        %605 = vmatpush1.bf16.msra.mxu0 0
        %606 = vmatprep.subr.bf16.mxu0 0
        %607 = vmatpush1.bf16.msra.mxu0 0
        %608 = vmatprep.subr.bf16.mxu0 0
        %609 = vmatpush1.bf16.msra.mxu0 0
        %610 = vmatprep.subr.bf16.mxu0 0
        %611 = vmatpush1.bf16.msra.mxu0 %v594
        %612 = vmatprep.subr.bf16.mxu0 0
        %613 = vmatpush1.bf16.msra.mxu0 %v593
        %614 = vmatprep.subr.bf16.mxu0 0
        %615 = vmatpush1.bf16.msra.mxu0 %v592
        %616 = vmatprep.subr.bf16.mxu0 0
        %617 = vmatpush1.bf16.msra.mxu0 %v591
        %618 = vmatprep.subr.bf16.mxu0 0
        %619 = vmatpush2.bf16.msra.mxu0 0
        %620 = vmatprep.subr.bf16.mxu0 0
        %621 = vmatpush2.bf16.msra.mxu0 0
        %622 = vmatprep.subr.bf16.mxu0 0
        %623 = vmatpush2.bf16.msra.mxu0 0
        %624 = vmatprep.subr.bf16.mxu0 0
        %625 = vmatpush2.bf16.msra.mxu0 0
        %626 = vmatprep.subr.bf16.mxu0 0
        %627 = vmatpush2.bf16.msra.mxu0 0
        %628 = vmatprep.subr.bf16.mxu0 0
        %629 = vmatpush2.bf16.msra.mxu0 0
        %630 = vmatprep.subr.bf16.mxu0 0
        %631 = vmatpush2.bf16.msra.mxu0 0
        %632 = vmatprep.subr.bf16.mxu0 0
        %633 = vmatpush2.bf16.msra.mxu0 0
        %634 = vmatprep.mubr.bf16.mxu0 0
        %635 = vmatmul.mubr.bf16.gmra.mxu0 %v600
        %v636 = vpop.f32.mrf.mxu0
        %v637 = vadd.f32 0.0, %v636
        %v638 = vpop.f32.mrf.mxu0
        %v639 = vpop.f32.mrf.mxu0
        %v640 = vpop.f32.mrf.mxu0
        %641 = vdwg.mxu0
        %v642 = vadd.f32 %v436, %v503
        %v643 = vadd.f32 %v642, %v570
        %v644 = vadd.f32 %v643, %v637
        %v645 = vsub.f32 %v644, %v436
        %v646 = vsub.f32 %v644, %v503
        %v647 = vsub.f32 %v644, %v570
        %v648 = vsub.f32 %v644, %v637
        %s649 = sld [smem:[#allocation8]]
        %v650 = vstv %s649
        %v651 = vmul.f32 %v650, %v645
        %v652 = vmul.f32 %v650, %v646
        %v653 = vmul.f32 %v650, %v647
        %v654 = vmul.f32 %v650, %v648
        %s655 = sld [smem:[#allocation8 + $0x1]]
        %v656 = vstv %s655
        %v657 = vmul.f32 %v656, %v645
        %v658 = vmul.f32 %v656, %v646
        %v659 = vmul.f32 %v656, %v647
        %v660 = vmul.f32 %v656, %v648
        %v665 = vrot.slane %v657, 2
        %v666 = vrot.slane %v658, 2
        %v667 = vrot.slane %v659, 2
        %v668 = vrot.slane %v660, 2
        %v673 = vadd.f32 %v651, %v665
        %v674 = vadd.f32 %v652, %v666
        %v675 = vadd.f32 %v653, %v667
        %v676 = vadd.f32 %v654, %v668
        %s677 = sld [smem:[#allocation8 + $0x2]]
        %v678 = vstv %s677
        %v679 = vmul.f32 %v678, %v645
        %v680 = vmul.f32 %v678, %v646
        %v681 = vmul.f32 %v678, %v647
        %v682 = vmul.f32 %v678, %v648
        %v687 = vrot.slane %v679, 4
        %v688 = vrot.slane %v680, 4
        %v689 = vrot.slane %v681, 4
        %v690 = vrot.slane %v682, 4
        %v695 = vadd.f32 %v673, %v687
        %v696 = vadd.f32 %v674, %v688
        %v697 = vadd.f32 %v675, %v689
        %v698 = vadd.f32 %v676, %v690
        %s699 = sld [smem:[#allocation8 + $0x3]]
        %v700 = vstv %s699
        %v701 = vmul.f32 %v700, %v645
        %v702 = vmul.f32 %v700, %v646
        %v703 = vmul.f32 %v700, %v647
        %v704 = vmul.f32 %v700, %v648
        %v709 = vrot.slane %v701, 6
        %v710 = vrot.slane %v702, 6
        %v711 = vrot.slane %v703, 6
        %v712 = vrot.slane %v704, 6
        %v717 = vadd.f32 %v695, %v709
        %v718 = vadd.f32 %v696, %v710
        %v719 = vadd.f32 %v697, %v711
        %v720 = vadd.f32 %v698, %v712
        %s721 = sld [smem:[#allocation9]]
        %v722 = vstv %s721
        %v723 = vadd.f32 %v717, %v722
        %v724 = vadd.f32 %v718, %v722
        %v725 = vadd.f32 %v719, %v722
        %v726 = vadd.f32 %v720, %v722
        %v727 = vmax.f32 %v723, 0.0
        %v728 = vmax.f32 %v724, 0.0
        %v729 = vmax.f32 %v725, 0.0
        %v730 = vmax.f32 %v726, 0.0
        %vm731 = vcmask 1041408
        %v732 = vsel %vm731, %v727, 0.0
        %v733 = vsel %vm731, %v728, 0.0
        %v734 = vadd.f32 %v732, %v733
        %v735 = vsel %vm731, %v729, 0.0
        %v736 = vadd.f32 %v734, %v735
        %v737 = vsel %vm731, %v730, 0.0
        %v738 = vadd.f32 %v736, %v737
        %s739 = sld [smem:[#allocation8 + $0x80]]
        %v740 = vstv %s739
        %v741 = vmul.f32 %v740, %v645
        %v742 = vmul.f32 %v740, %v646
        %v743 = vmul.f32 %v740, %v647
        %v744 = vmul.f32 %v740, %v648
        %s745 = sld [smem:[#allocation8 + $0x81]]
        %v746 = vstv %s745
        %v747 = vmul.f32 %v746, %v645
        %v748 = vmul.f32 %v746, %v646
        %v749 = vmul.f32 %v746, %v647
        %v750 = vmul.f32 %v746, %v648
        %v755 = vrot.slane %v747, 2
        %v756 = vrot.slane %v748, 2
        %v757 = vrot.slane %v749, 2
        %v758 = vrot.slane %v750, 2
        %v763 = vadd.f32 %v741, %v755
        %v764 = vadd.f32 %v742, %v756
        %v765 = vadd.f32 %v743, %v757
        %v766 = vadd.f32 %v744, %v758
        %s767 = sld [smem:[#allocation8 + $0x82]]
        %v768 = vstv %s767
        %v769 = vmul.f32 %v768, %v645
        %v770 = vmul.f32 %v768, %v646
        %v771 = vmul.f32 %v768, %v647
        %v772 = vmul.f32 %v768, %v648
        %v777 = vrot.slane %v769, 4
        %v778 = vrot.slane %v770, 4
        %v779 = vrot.slane %v771, 4
        %v780 = vrot.slane %v772, 4
        %v785 = vadd.f32 %v763, %v777
        %v786 = vadd.f32 %v764, %v778
        %v787 = vadd.f32 %v765, %v779
        %v788 = vadd.f32 %v766, %v780
        %s789 = sld [smem:[#allocation8 + $0x83]]
        %v790 = vstv %s789
        %v791 = vmul.f32 %v790, %v645
        %v792 = vmul.f32 %v790, %v646
        %v793 = vmul.f32 %v790, %v647
        %v794 = vmul.f32 %v790, %v648
        %v799 = vrot.slane %v791, 6
        %v800 = vrot.slane %v792, 6
        %v801 = vrot.slane %v793, 6
        %v802 = vrot.slane %v794, 6
        %v807 = vadd.f32 %v785, %v799
        %v808 = vadd.f32 %v786, %v800
        %v809 = vadd.f32 %v787, %v801
        %v810 = vadd.f32 %v788, %v802
        %s811 = sld [smem:[#allocation9 + $0x1]]
        %v812 = vstv %s811
        %v813 = vadd.f32 %v807, %v812
        %v814 = vadd.f32 %v808, %v812
        %v815 = vadd.f32 %v809, %v812
        %v816 = vadd.f32 %v810, %v812
        %v817 = vmax.f32 %v813, 0.0
        %v818 = vmax.f32 %v814, 0.0
        %v819 = vmax.f32 %v815, 0.0
        %v820 = vmax.f32 %v816, 0.0
        %v821 = vsel %vm731, %v817, 0.0
        %v822 = vsel %vm731, %v818, 0.0
        %v823 = vadd.f32 %v821, %v822
        %v824 = vsel %vm731, %v819, 0.0
        %v825 = vadd.f32 %v823, %v824
        %v826 = vsel %vm731, %v820, 0.0
        %v827 = vadd.f32 %v825, %v826
        %s828 = sld [smem:[#allocation8 + $0x100]]
        %v829 = vstv %s828
        %v830 = vmul.f32 %v829, %v645
        %v831 = vmul.f32 %v829, %v646
        %v832 = vmul.f32 %v829, %v647
        %v833 = vmul.f32 %v829, %v648
        %s834 = sld [smem:[#allocation8 + $0x101]]
        %v835 = vstv %s834
        %v836 = vmul.f32 %v835, %v645
        %v837 = vmul.f32 %v835, %v646
        %v838 = vmul.f32 %v835, %v647
        %v839 = vmul.f32 %v835, %v648
        %v844 = vrot.slane %v836, 2
        %v845 = vrot.slane %v837, 2
        %v846 = vrot.slane %v838, 2
        %v847 = vrot.slane %v839, 2
        %v852 = vadd.f32 %v830, %v844
        %v853 = vadd.f32 %v831, %v845
        %v854 = vadd.f32 %v832, %v846
        %v855 = vadd.f32 %v833, %v847
        %s856 = sld [smem:[#allocation8 + $0x102]]
        %v857 = vstv %s856
        %v858 = vmul.f32 %v857, %v645
        %v859 = vmul.f32 %v857, %v646
        %v860 = vmul.f32 %v857, %v647
        %v861 = vmul.f32 %v857, %v648
        %v866 = vrot.slane %v858, 4
        %v867 = vrot.slane %v859, 4
        %v868 = vrot.slane %v860, 4
        %v869 = vrot.slane %v861, 4
        %v874 = vadd.f32 %v852, %v866
        %v875 = vadd.f32 %v853, %v867
        %v876 = vadd.f32 %v854, %v868
        %v877 = vadd.f32 %v855, %v869
        %s878 = sld [smem:[#allocation8 + $0x103]]
        %v879 = vstv %s878
        %v880 = vmul.f32 %v879, %v645
        %v881 = vmul.f32 %v879, %v646
        %v882 = vmul.f32 %v879, %v647
        %v883 = vmul.f32 %v879, %v648
        %v888 = vrot.slane %v880, 6
        %v889 = vrot.slane %v881, 6
        %v890 = vrot.slane %v882, 6
        %v891 = vrot.slane %v883, 6
        %v896 = vadd.f32 %v874, %v888
        %v897 = vadd.f32 %v875, %v889
        %v898 = vadd.f32 %v876, %v890
        %v899 = vadd.f32 %v877, %v891
        %s900 = sld [smem:[#allocation9 + $0x2]]
        %v901 = vstv %s900
        %v902 = vadd.f32 %v896, %v901
        %v903 = vadd.f32 %v897, %v901
        %v904 = vadd.f32 %v898, %v901
        %v905 = vadd.f32 %v899, %v901
        %v906 = vmax.f32 %v902, 0.0
        %v907 = vmax.f32 %v903, 0.0
        %v908 = vmax.f32 %v904, 0.0
        %v909 = vmax.f32 %v905, 0.0
        %v910 = vsel %vm731, %v906, 0.0
        %v911 = vsel %vm731, %v907, 0.0
        %v912 = vadd.f32 %v910, %v911
        %v913 = vsel %vm731, %v908, 0.0
        %v914 = vadd.f32 %v912, %v913
        %v915 = vsel %vm731, %v909, 0.0
        %v916 = vadd.f32 %v914, %v915
        %s917 = sld [smem:[#allocation8 + $0x180]]
        %v918 = vstv %s917
        %v919 = vmul.f32 %v918, %v645
        %v920 = vmul.f32 %v918, %v646
        %v921 = vmul.f32 %v918, %v647
        %v922 = vmul.f32 %v918, %v648
        %s923 = sld [smem:[#allocation8 + $0x181]]
        %v924 = vstv %s923
        %v925 = vmul.f32 %v924, %v645
        %v926 = vmul.f32 %v924, %v646
        %v927 = vmul.f32 %v924, %v647
        %v928 = vmul.f32 %v924, %v648
        %v933 = vrot.slane %v925, 2
        %v934 = vrot.slane %v926, 2
        %v935 = vrot.slane %v927, 2
        %v936 = vrot.slane %v928, 2
        %v941 = vadd.f32 %v919, %v933
        %v942 = vadd.f32 %v920, %v934
        %v943 = vadd.f32 %v921, %v935
        %v944 = vadd.f32 %v922, %v936
        %s945 = sld [smem:[#allocation8 + $0x182]]
        %v946 = vstv %s945
        %v947 = vmul.f32 %v946, %v645
        %v948 = vmul.f32 %v946, %v646
        %v949 = vmul.f32 %v946, %v647
        %v950 = vmul.f32 %v946, %v648
        %v955 = vrot.slane %v947, 4
        %v956 = vrot.slane %v948, 4
        %v957 = vrot.slane %v949, 4
        %v958 = vrot.slane %v950, 4
        %v963 = vadd.f32 %v941, %v955
        %v964 = vadd.f32 %v942, %v956
        %v965 = vadd.f32 %v943, %v957
        %v966 = vadd.f32 %v944, %v958
        %s967 = sld [smem:[#allocation8 + $0x183]]
        %v968 = vstv %s967
        %v969 = vmul.f32 %v968, %v645
        %v970 = vmul.f32 %v968, %v646
        %v971 = vmul.f32 %v968, %v647
        %v972 = vmul.f32 %v968, %v648
        %v977 = vrot.slane %v969, 6
        %v978 = vrot.slane %v970, 6
        %v979 = vrot.slane %v971, 6
        %v980 = vrot.slane %v972, 6
        %v985 = vadd.f32 %v963, %v977
        %v986 = vadd.f32 %v964, %v978
        %v987 = vadd.f32 %v965, %v979
        %v988 = vadd.f32 %v966, %v980
        %s989 = sld [smem:[#allocation9 + $0x3]]
        %v990 = vstv %s989
        %v991 = vadd.f32 %v985, %v990
        %v992 = vadd.f32 %v986, %v990
        %v993 = vadd.f32 %v987, %v990
        %v994 = vadd.f32 %v988, %v990
        %v995 = vmax.f32 %v991, 0.0
        %v996 = vmax.f32 %v992, 0.0
        %v997 = vmax.f32 %v993, 0.0
        %v998 = vmax.f32 %v994, 0.0
        %v999 = vsel %vm731, %v995, 0.0
        %v1000 = vsel %vm731, %v996, 0.0
        %v1001 = vadd.f32 %v999, %v1000
        %v1002 = vsel %vm731, %v997, 0.0
        %v1003 = vadd.f32 %v1001, %v1002
        %v1004 = vsel %vm731, %v998, 0.0
        %v1005 = vadd.f32 %v1003, %v1004
        %s1006 = sld [smem:[#allocation8 + $0x200]]
        %v1007 = vstv %s1006
        %v1008 = vmul.f32 %v1007, %v645
        %v1009 = vmul.f32 %v1007, %v646
        %v1010 = vmul.f32 %v1007, %v647
        %v1011 = vmul.f32 %v1007, %v648
        %s1012 = sld [smem:[#allocation8 + $0x201]]
        %v1013 = vstv %s1012
        %v1014 = vmul.f32 %v1013, %v645
        %v1015 = vmul.f32 %v1013, %v646
        %v1016 = vmul.f32 %v1013, %v647
        %v1017 = vmul.f32 %v1013, %v648
        %v1022 = vrot.slane %v1014, 2
        %v1023 = vrot.slane %v1015, 2
        %v1024 = vrot.slane %v1016, 2
        %v1025 = vrot.slane %v1017, 2
        %v1030 = vadd.f32 %v1008, %v1022
        %v1031 = vadd.f32 %v1009, %v1023
        %v1032 = vadd.f32 %v1010, %v1024
        %v1033 = vadd.f32 %v1011, %v1025
        %s1034 = sld [smem:[#allocation8 + $0x202]]
        %v1035 = vstv %s1034
        %v1036 = vmul.f32 %v1035, %v645
        %v1037 = vmul.f32 %v1035, %v646
        %v1038 = vmul.f32 %v1035, %v647
        %v1039 = vmul.f32 %v1035, %v648
        %v1044 = vrot.slane %v1036, 4
        %v1045 = vrot.slane %v1037, 4
        %v1046 = vrot.slane %v1038, 4
        %v1047 = vrot.slane %v1039, 4
        %v1052 = vadd.f32 %v1030, %v1044
        %v1053 = vadd.f32 %v1031, %v1045
        %v1054 = vadd.f32 %v1032, %v1046
        %v1055 = vadd.f32 %v1033, %v1047
        %s1056 = sld [smem:[#allocation8 + $0x203]]
        %v1057 = vstv %s1056
        %v1058 = vmul.f32 %v1057, %v645
        %v1059 = vmul.f32 %v1057, %v646
        %v1060 = vmul.f32 %v1057, %v647
        %v1061 = vmul.f32 %v1057, %v648
        %v1066 = vrot.slane %v1058, 6
        %v1067 = vrot.slane %v1059, 6
        %v1068 = vrot.slane %v1060, 6
        %v1069 = vrot.slane %v1061, 6
        %v1074 = vadd.f32 %v1052, %v1066
        %v1075 = vadd.f32 %v1053, %v1067
        %v1076 = vadd.f32 %v1054, %v1068
        %v1077 = vadd.f32 %v1055, %v1069
        %s1078 = sld [smem:[#allocation9 + $0x4]]
        %v1079 = vstv %s1078
        %v1080 = vadd.f32 %v1074, %v1079
        %v1081 = vadd.f32 %v1075, %v1079
        %v1082 = vadd.f32 %v1076, %v1079
        %v1083 = vadd.f32 %v1077, %v1079
        %v1084 = vmax.f32 %v1080, 0.0
        %v1085 = vmax.f32 %v1081, 0.0
        %v1086 = vmax.f32 %v1082, 0.0
        %v1087 = vmax.f32 %v1083, 0.0
        %v1088 = vsel %vm731, %v1084, 0.0
        %v1089 = vsel %vm731, %v1085, 0.0
        %v1090 = vadd.f32 %v1088, %v1089
        %v1091 = vsel %vm731, %v1086, 0.0
        %v1092 = vadd.f32 %v1090, %v1091
        %v1093 = vsel %vm731, %v1087, 0.0
        %v1094 = vadd.f32 %v1092, %v1093
        %s1095 = sld [smem:[#allocation8 + $0x280]]
        %v1096 = vstv %s1095
        %v1097 = vmul.f32 %v1096, %v645
        %v1098 = vmul.f32 %v1096, %v646
        %v1099 = vmul.f32 %v1096, %v647
        %v1100 = vmul.f32 %v1096, %v648
        %s1101 = sld [smem:[#allocation8 + $0x281]]
        %v1102 = vstv %s1101
        %v1103 = vmul.f32 %v1102, %v645
        %v1104 = vmul.f32 %v1102, %v646
        %v1105 = vmul.f32 %v1102, %v647
        %v1106 = vmul.f32 %v1102, %v648
        %v1111 = vrot.slane %v1103, 2
        %v1112 = vrot.slane %v1104, 2
        %v1113 = vrot.slane %v1105, 2
        %v1114 = vrot.slane %v1106, 2
        %v1119 = vadd.f32 %v1097, %v1111
        %v1120 = vadd.f32 %v1098, %v1112
        %v1121 = vadd.f32 %v1099, %v1113
        %v1122 = vadd.f32 %v1100, %v1114
        %s1123 = sld [smem:[#allocation8 + $0x282]]
        %v1124 = vstv %s1123
        %v1125 = vmul.f32 %v1124, %v645
        %v1126 = vmul.f32 %v1124, %v646
        %v1127 = vmul.f32 %v1124, %v647
        %v1128 = vmul.f32 %v1124, %v648
        %v1133 = vrot.slane %v1125, 4
        %v1134 = vrot.slane %v1126, 4
        %v1135 = vrot.slane %v1127, 4
        %v1136 = vrot.slane %v1128, 4
        %v1141 = vadd.f32 %v1119, %v1133
        %v1142 = vadd.f32 %v1120, %v1134
        %v1143 = vadd.f32 %v1121, %v1135
        %v1144 = vadd.f32 %v1122, %v1136
        %s1145 = sld [smem:[#allocation8 + $0x283]]
        %v1146 = vstv %s1145
        %v1147 = vmul.f32 %v1146, %v645
        %v1148 = vmul.f32 %v1146, %v646
        %v1149 = vmul.f32 %v1146, %v647
        %v1150 = vmul.f32 %v1146, %v648
        %v1155 = vrot.slane %v1147, 6
        %v1156 = vrot.slane %v1148, 6
        %v1157 = vrot.slane %v1149, 6
        %v1158 = vrot.slane %v1150, 6
        %v1163 = vadd.f32 %v1141, %v1155
        %v1164 = vadd.f32 %v1142, %v1156
        %v1165 = vadd.f32 %v1143, %v1157
        %v1166 = vadd.f32 %v1144, %v1158
        %s1167 = sld [smem:[#allocation9 + $0x5]]
        %v1168 = vstv %s1167
        %v1169 = vadd.f32 %v1163, %v1168
        %v1170 = vadd.f32 %v1164, %v1168
        %v1171 = vadd.f32 %v1165, %v1168
        %v1172 = vadd.f32 %v1166, %v1168
        %v1173 = vmax.f32 %v1169, 0.0
        %v1174 = vmax.f32 %v1170, 0.0
        %v1175 = vmax.f32 %v1171, 0.0
        %v1176 = vmax.f32 %v1172, 0.0
        %v1177 = vsel %vm731, %v1173, 0.0
        %v1178 = vsel %vm731, %v1174, 0.0
        %v1179 = vadd.f32 %v1177, %v1178
        %v1180 = vsel %vm731, %v1175, 0.0
        %v1181 = vadd.f32 %v1179, %v1180
        %v1182 = vsel %vm731, %v1176, 0.0
        %v1183 = vadd.f32 %v1181, %v1182
        %s1184 = sld [smem:[#allocation8 + $0x300]]
        %v1185 = vstv %s1184
        %v1186 = vmul.f32 %v1185, %v645
        %v1187 = vmul.f32 %v1185, %v646
        %v1188 = vmul.f32 %v1185, %v647
        %v1189 = vmul.f32 %v1185, %v648
        %s1190 = sld [smem:[#allocation8 + $0x301]]
        %v1191 = vstv %s1190
        %v1192 = vmul.f32 %v1191, %v645
        %v1193 = vmul.f32 %v1191, %v646
        %v1194 = vmul.f32 %v1191, %v647
        %v1195 = vmul.f32 %v1191, %v648
        %v1200 = vrot.slane %v1192, 2
        %v1201 = vrot.slane %v1193, 2
        %v1202 = vrot.slane %v1194, 2
        %v1203 = vrot.slane %v1195, 2
        %v1208 = vadd.f32 %v1186, %v1200
        %v1209 = vadd.f32 %v1187, %v1201
        %v1210 = vadd.f32 %v1188, %v1202
        %v1211 = vadd.f32 %v1189, %v1203
        %s1212 = sld [smem:[#allocation8 + $0x302]]
        %v1213 = vstv %s1212
        %v1214 = vmul.f32 %v1213, %v645
        %v1215 = vmul.f32 %v1213, %v646
        %v1216 = vmul.f32 %v1213, %v647
        %v1217 = vmul.f32 %v1213, %v648
        %v1222 = vrot.slane %v1214, 4
        %v1223 = vrot.slane %v1215, 4
        %v1224 = vrot.slane %v1216, 4
        %v1225 = vrot.slane %v1217, 4
        %v1230 = vadd.f32 %v1208, %v1222
        %v1231 = vadd.f32 %v1209, %v1223
        %v1232 = vadd.f32 %v1210, %v1224
        %v1233 = vadd.f32 %v1211, %v1225
        %s1234 = sld [smem:[#allocation8 + $0x303]]
        %v1235 = vstv %s1234
        %v1236 = vmul.f32 %v1235, %v645
        %v1237 = vmul.f32 %v1235, %v646
        %v1238 = vmul.f32 %v1235, %v647
        %v1239 = vmul.f32 %v1235, %v648
        %v1244 = vrot.slane %v1236, 6
        %v1245 = vrot.slane %v1237, 6
        %v1246 = vrot.slane %v1238, 6
        %v1247 = vrot.slane %v1239, 6
        %v1252 = vadd.f32 %v1230, %v1244
        %v1253 = vadd.f32 %v1231, %v1245
        %v1254 = vadd.f32 %v1232, %v1246
        %v1255 = vadd.f32 %v1233, %v1247
        %s1256 = sld [smem:[#allocation9 + $0x6]]
        %v1257 = vstv %s1256
        %v1258 = vadd.f32 %v1252, %v1257
        %v1259 = vadd.f32 %v1253, %v1257
        %v1260 = vadd.f32 %v1254, %v1257
        %v1261 = vadd.f32 %v1255, %v1257
        %v1262 = vmax.f32 %v1258, 0.0
        %v1263 = vmax.f32 %v1259, 0.0
        %v1264 = vmax.f32 %v1260, 0.0
        %v1265 = vmax.f32 %v1261, 0.0
        %v1266 = vsel %vm731, %v1262, 0.0
        %v1267 = vsel %vm731, %v1263, 0.0
        %v1268 = vadd.f32 %v1266, %v1267
        %v1269 = vsel %vm731, %v1264, 0.0
        %v1270 = vadd.f32 %v1268, %v1269
        %v1271 = vsel %vm731, %v1265, 0.0
        %v1272 = vadd.f32 %v1270, %v1271
        %s1273 = sld [smem:[#allocation8 + $0x380]]
        %v1274 = vstv %s1273
        %v1275 = vmul.f32 %v1274, %v645
        %v1276 = vmul.f32 %v1274, %v646
        %v1277 = vmul.f32 %v1274, %v647
        %v1278 = vmul.f32 %v1274, %v648
        %s1279 = sld [smem:[#allocation8 + $0x381]]
        %v1280 = vstv %s1279
        %v1281 = vmul.f32 %v1280, %v645
        %v1282 = vmul.f32 %v1280, %v646
        %v1283 = vmul.f32 %v1280, %v647
        %v1284 = vmul.f32 %v1280, %v648
        %v1289 = vrot.slane %v1281, 2
        %v1290 = vrot.slane %v1282, 2
        %v1291 = vrot.slane %v1283, 2
        %v1292 = vrot.slane %v1284, 2
        %v1297 = vadd.f32 %v1275, %v1289
        %v1298 = vadd.f32 %v1276, %v1290
        %v1299 = vadd.f32 %v1277, %v1291
        %v1300 = vadd.f32 %v1278, %v1292
        %s1301 = sld [smem:[#allocation8 + $0x382]]
        %v1302 = vstv %s1301
        %v1303 = vmul.f32 %v1302, %v645
        %v1304 = vmul.f32 %v1302, %v646
        %v1305 = vmul.f32 %v1302, %v647
        %v1306 = vmul.f32 %v1302, %v648
        %v1311 = vrot.slane %v1303, 4
        %v1312 = vrot.slane %v1304, 4
        %v1313 = vrot.slane %v1305, 4
        %v1314 = vrot.slane %v1306, 4
        %v1319 = vadd.f32 %v1297, %v1311
        %v1320 = vadd.f32 %v1298, %v1312
        %v1321 = vadd.f32 %v1299, %v1313
        %v1322 = vadd.f32 %v1300, %v1314
        %s1323 = sld [smem:[#allocation8 + $0x383]]
        %v1324 = vstv %s1323
        %v1325 = vmul.f32 %v1324, %v645
        %v1326 = vmul.f32 %v1324, %v646
        %v1327 = vmul.f32 %v1324, %v647
        %v1328 = vmul.f32 %v1324, %v648
        %v1333 = vrot.slane %v1325, 6
        %v1334 = vrot.slane %v1326, 6
        %v1335 = vrot.slane %v1327, 6
        %v1336 = vrot.slane %v1328, 6
        %v1341 = vadd.f32 %v1319, %v1333
        %v1342 = vadd.f32 %v1320, %v1334
        %v1343 = vadd.f32 %v1321, %v1335
        %v1344 = vadd.f32 %v1322, %v1336
        %s1345 = sld [smem:[#allocation9 + $0x7]]
        %v1346 = vstv %s1345
        %v1347 = vadd.f32 %v1341, %v1346
        %v1348 = vadd.f32 %v1342, %v1346
        %v1349 = vadd.f32 %v1343, %v1346
        %v1350 = vadd.f32 %v1344, %v1346
        %v1351 = vmax.f32 %v1347, 0.0
        %v1352 = vmax.f32 %v1348, 0.0
        %v1353 = vmax.f32 %v1349, 0.0
        %v1354 = vmax.f32 %v1350, 0.0
        %v1355 = vsel %vm731, %v1351, 0.0
        %v1356 = vsel %vm731, %v1352, 0.0
        %v1357 = vadd.f32 %v1355, %v1356
        %v1358 = vsel %vm731, %v1353, 0.0
        %v1359 = vadd.f32 %v1357, %v1358
        %v1360 = vsel %vm731, %v1354, 0.0
        %v1361 = vadd.f32 %v1359, %v1360
        %s1362 = sld [smem:[#allocation11]]
        %v1363 = vstv %s1362
        %v1364 = vmul.f32 %v1363, %v738
        %s1365 = sld [smem:[#allocation11 + $0x1]]
        %v1366 = vstv %s1365
        %v1367 = vmul.f32 %v1366, %v827
        %v1368 = vadd.f32 %v1364, %v1367
        %s1369 = sld [smem:[#allocation11 + $0x2]]
        %v1370 = vstv %s1369
        %v1371 = vmul.f32 %v1370, %v916
        %v1372 = vadd.f32 %v1368, %v1371
        %s1373 = sld [smem:[#allocation11 + $0x3]]
        %v1374 = vstv %s1373
        %v1375 = vmul.f32 %v1374, %v1005
        %v1376 = vadd.f32 %v1372, %v1375
        %s1377 = sld [smem:[#allocation11 + $0x4]]
        %v1378 = vstv %s1377
        %v1379 = vmul.f32 %v1378, %v1094
        %v1380 = vadd.f32 %v1376, %v1379
        %s1381 = sld [smem:[#allocation11 + $0x5]]
        %v1382 = vstv %s1381
        %v1383 = vmul.f32 %v1382, %v1183
        %v1384 = vadd.f32 %v1380, %v1383
        %s1385 = sld [smem:[#allocation11 + $0x6]]
        %v1386 = vstv %s1385
        %v1387 = vmul.f32 %v1386, %v1272
        %v1388 = vadd.f32 %v1384, %v1387
        %s1389 = sld [smem:[#allocation11 + $0x7]]
        %v1390 = vstv %s1389
        %v1391 = vmul.f32 %v1390, %v1361
        %v1392 = vadd.f32 %v1388, %v1391
        %s1393 = sld [smem:[#allocation12]]
        %v1394 = vstv %s1393
        %v1395 = vadd.f32 %v1392, %v1394
        %s1396 = sld [smem:[#allocation11 + $0x80]]
        %v1397 = vstv %s1396
        %v1398 = vmul.f32 %v1397, %v738
        %s1399 = sld [smem:[#allocation11 + $0x81]]
        %v1400 = vstv %s1399
        %v1401 = vmul.f32 %v1400, %v827
        %v1402 = vadd.f32 %v1398, %v1401
        %s1403 = sld [smem:[#allocation11 + $0x82]]
        %v1404 = vstv %s1403
        %v1405 = vmul.f32 %v1404, %v916
        %v1406 = vadd.f32 %v1402, %v1405
        %s1407 = sld [smem:[#allocation11 + $0x83]]
        %v1408 = vstv %s1407
        %v1409 = vmul.f32 %v1408, %v1005
        %v1410 = vadd.f32 %v1406, %v1409
        %s1411 = sld [smem:[#allocation11 + $0x84]]
        %v1412 = vstv %s1411
        %v1413 = vmul.f32 %v1412, %v1094
        %v1414 = vadd.f32 %v1410, %v1413
        %s1415 = sld [smem:[#allocation11 + $0x85]]
        %v1416 = vstv %s1415
        %v1417 = vmul.f32 %v1416, %v1183
        %v1418 = vadd.f32 %v1414, %v1417
        %s1419 = sld [smem:[#allocation11 + $0x86]]
        %v1420 = vstv %s1419
        %v1421 = vmul.f32 %v1420, %v1272
        %v1422 = vadd.f32 %v1418, %v1421
        %s1423 = sld [smem:[#allocation11 + $0x87]]
        %v1424 = vstv %s1423
        %v1425 = vmul.f32 %v1424, %v1361
        %v1426 = vadd.f32 %v1422, %v1425
        %s1427 = sld [smem:[#allocation12 + $0x1]]
        %v1428 = vstv %s1427
        %v1429 = vadd.f32 %v1426, %v1428
        %s1430 = sld [smem:[#allocation11 + $0x100]]
        %v1431 = vstv %s1430
        %v1432 = vmul.f32 %v1431, %v738
        %s1433 = sld [smem:[#allocation11 + $0x101]]
        %v1434 = vstv %s1433
        %v1435 = vmul.f32 %v1434, %v827
        %v1436 = vadd.f32 %v1432, %v1435
        %s1437 = sld [smem:[#allocation11 + $0x102]]
        %v1438 = vstv %s1437
        %v1439 = vmul.f32 %v1438, %v916
        %v1440 = vadd.f32 %v1436, %v1439
        %s1441 = sld [smem:[#allocation11 + $0x103]]
        %v1442 = vstv %s1441
        %v1443 = vmul.f32 %v1442, %v1005
        %v1444 = vadd.f32 %v1440, %v1443
        %s1445 = sld [smem:[#allocation11 + $0x104]]
        %v1446 = vstv %s1445
        %v1447 = vmul.f32 %v1446, %v1094
        %v1448 = vadd.f32 %v1444, %v1447
        %s1449 = sld [smem:[#allocation11 + $0x105]]
        %v1450 = vstv %s1449
        %v1451 = vmul.f32 %v1450, %v1183
        %v1452 = vadd.f32 %v1448, %v1451
        %s1453 = sld [smem:[#allocation11 + $0x106]]
        %v1454 = vstv %s1453
        %v1455 = vmul.f32 %v1454, %v1272
        %v1456 = vadd.f32 %v1452, %v1455
        %s1457 = sld [smem:[#allocation11 + $0x107]]
        %v1458 = vstv %s1457
        %v1459 = vmul.f32 %v1458, %v1361
        %v1460 = vadd.f32 %v1456, %v1459
        %s1461 = sld [smem:[#allocation12 + $0x2]]
        %v1462 = vstv %s1461
        %v1463 = vadd.f32 %v1460, %v1462
        %s1464 = sld [smem:[#allocation11 + $0x180]]
        %v1465 = vstv %s1464
        %v1466 = vmul.f32 %v1465, %v738
        %s1467 = sld [smem:[#allocation11 + $0x181]]
        %v1468 = vstv %s1467
        %v1469 = vmul.f32 %v1468, %v827
        %v1470 = vadd.f32 %v1466, %v1469
        %s1471 = sld [smem:[#allocation11 + $0x182]]
        %v1472 = vstv %s1471
        %v1473 = vmul.f32 %v1472, %v916
        %v1474 = vadd.f32 %v1470, %v1473
        %s1475 = sld [smem:[#allocation11 + $0x183]]
        %v1476 = vstv %s1475
        %v1477 = vmul.f32 %v1476, %v1005
        %v1478 = vadd.f32 %v1474, %v1477
        %s1479 = sld [smem:[#allocation11 + $0x184]]
        %v1480 = vstv %s1479
        %v1481 = vmul.f32 %v1480, %v1094
        %v1482 = vadd.f32 %v1478, %v1481
        %s1483 = sld [smem:[#allocation11 + $0x185]]
        %v1484 = vstv %s1483
        %v1485 = vmul.f32 %v1484, %v1183
        %v1486 = vadd.f32 %v1482, %v1485
        %s1487 = sld [smem:[#allocation11 + $0x186]]
        %v1488 = vstv %s1487
        %v1489 = vmul.f32 %v1488, %v1272
        %v1490 = vadd.f32 %v1486, %v1489
        %s1491 = sld [smem:[#allocation11 + $0x187]]
        %v1492 = vstv %s1491
        %v1493 = vmul.f32 %v1492, %v1361
        %v1494 = vadd.f32 %v1490, %v1493
        %s1495 = sld [smem:[#allocation12 + $0x3]]
        %v1496 = vstv %s1495
        %v1497 = vadd.f32 %v1494, %v1496
        %v1499 = vrot.slane %v1429, 6
        %v1502 = vrot.slane %v1463, 4
        %v1505 = vrot.slane %v1497, 2
        %v1507 = vsel %vm731, %v1395, %v1499
        %vm1508 = vcmask 1043456
        %v1509 = vsel %vm1508, %v1507, %v1502
        %vm1510 = vcmask 1045504
        %v1511 = vsel %vm1510, %v1509, %v1505
        %1512 = vst [vmem:[%s335] sm:$0xff] %v1511
        %s1513 = sand.u32 %s166, 1
        %s1514 = scalar_lea.sflag [#allocation4], %s1513
        %s1515 = sand.u32 %s166, 1
        %s1516 = smul.addr %s1515, 8
        %s1517 = scalar_lea.vmem [#allocation14], %s1516
        // Predicated region
        $region69: #{tpu_custom_call.1} parent=43 // pred_check
          %p1518 = pneg %p176
        $region70: #{tpu_custom_call.1} parent=43 // pred_check_branch
          %1520 = sbr.rel (%p1518) target = $region72
        $region71: #{tpu_custom_call.1} parent=43 // pred_region
          %s1522 = ssub.s32 128, 128
          %1523 = vsyncadd %s1514, %s1522
          %s1524 = smul.addr %s27, 128
          %s1525 = scalar_lea.hbm %s6, %s1524
          %s1527 = sshll.u32 %s1517, 4
          %s1528 = int_to_ptr.vmem [resolvable:$true] %s1527
          %1530 = dma.vmem_to_hbm [thread:$0]  %s1528, 128, %s1525, %s1514
        $region72: #{tpu_custom_call.1} parent=43 // pred_fallthru
          _
      $region44: #{tpu_custom_call.1} parent=5 // pred_fallthru
        _
      %p1531 = scmp.le.s32.totalorder 2, %s22
      // Predicated region
      $region73: #{tpu_custom_call.1} parent=5 // pred_check
        %p1532 = pneg %p1531
      $region74: #{tpu_custom_call.1} parent=5 // pred_check_branch
        %1534 = sbr.rel (%p1532) target = $region76
      $region75: #{tpu_custom_call.1} parent=5 // pred_region
        %s1535 = ssub.s32 %s22, 2
        // Predicated region
        $region77: #{tpu_custom_call.1} parent=75 // pred_check
          %p1536 = pneg %p182
        $region78: #{tpu_custom_call.1} parent=75 // pred_check_branch
          %1538 = sbr.rel (%p1536) target = $region80
        $region79: #{tpu_custom_call.1} parent=75 // pred_region
          %s1539 = sand.u32 %s167, 1
          %s1540 = scalar_lea.sflag [#allocation4], %s1539
          %s1541 = sand.u32 %s167, 1
          %s1542 = smul.addr %s1541, 8
          %s1543 = scalar_lea.vmem [#allocation14], %s1542
          %1544 = dma.done %s1540, 128
        $region80: #{tpu_custom_call.1} parent=75 // pred_fallthru
          _
      $region76: #{tpu_custom_call.1} parent=5 // pred_fallthru
        _
    $region6: #{tpu_custom_call.1} parent=1 // loop_footer
      %s26 = sadd.s32 1, %s22
    $region7: #{tpu_custom_call.1} parent=1 // loop_footer_branch
      %21 = sbr.rel target = $region3
    $region8: #{tpu_custom_call.1} parent=1 // loop_exit
      _
    %1545 = vsyncpa [#allocation3], 1
    %s1546 = scalar_lea.sflag [#allocation3], 1
    %1547 = vsyncpa %s1546, 1
    %1548 = vsyncpa [#allocation7], 1
    %s1549 = scalar_lea.sflag [#allocation7], 1
    %1550 = vsyncpa %s1549, 1
    %1551 = vsyncpa [#allocation4], 1
    %s1552 = scalar_lea.sflag [#allocation4], 1
    %1553 = vsyncpa %s1552, 1
    %1554 = vsyncpa [#allocation5], 1
    %s1555 = scalar_lea.sflag [#allocation5], 1
    %1556 = vsyncpa %s1555, 1
    %1557 = vsyncpa [#allocation10], 1
    %1558 = vsyncpa [#allocation13], 1

</llo_original>
